<compile_context>
chip_gen: v6e
topology: v6e:2x2x1
jax: 0.10.0
libtpu: 0.0.40
codegen_flags: <defaults>
</compile_context>

<pallas_src>
import functools
import math

import jax
import jax.numpy as jnp
from jax import lax
from jax.experimental import pallas as pl
from jax.experimental.pallas import tpu as pltpu


# ----------------------------------------------------------------------------
# Fused Pallas kernel: embedding + transformer block + logits + masked CE
# (one grid step = TB whole sequences = TM = TB*S rows)
# ----------------------------------------------------------------------------
def _maskgit_block_kernel(ids_ref, tgt_ref, msk_ref,
                          tok_emb_ref, pos_emb_ref,
                          wqkv_ref, wo_ref, w1_ref, w2_ref, wout_ref,
                          part_ref, *, d_real, v_real, tb, seq):
    dp = tok_emb_ref.shape[-1]          # padded feature dim (multiple of 128)
    vemb_p = tok_emb_ref.shape[0]       # padded embedding-vocab rows
    vp = wout_ref.shape[-1]             # padded output-vocab dim
    tm = tb * seq                       # rows in this tile
    inv_d = 1.0 / d_real

    def ln(z):
        # LayerNorm over the *real* feature width.  Padded channels of z are
        # zero, so sums over the padded width equal sums over the real width;
        # E[x^2]-mu^2 biased variance matches F.layer_norm (eps=1e-5).
        mu = jnp.sum(z, axis=-1, keepdims=True) * inv_d
        ms = jnp.sum(z * z, axis=-1, keepdims=True) * inv_d
        var = jnp.maximum(ms - mu * mu, 0.0)
        return (z - mu) * lax.rsqrt(var + 1e-5)

    # ---- fused embedding gather: one_hot(ids) @ token_emb (MXU) + pos_emb ----
    ids = ids_ref[...]                                           # (tm, 1) int32
    eid = lax.broadcasted_iota(jnp.int32, (tm, vemb_p), 1)
    onehot = (eid == ids).astype(jnp.bfloat16)
    h = jnp.dot(onehot, tok_emb_ref[...],
                preferred_element_type=jnp.float32)              # (tm, dp) f32
    h = (h.reshape(tb, seq, dp) + pos_emb_ref[...][None, :, :]).reshape(tm, dp)

    # ---- single-head self-attention (pre-LN); 1/sqrt(D) folded into Wq ----
    x1 = ln(h).astype(jnp.bfloat16)
    qkv = jnp.dot(x1, wqkv_ref[...], preferred_element_type=jnp.float32)
    q = qkv[:, :dp].reshape(tb, seq, dp).astype(jnp.bfloat16)
    k = qkv[:, dp:2 * dp].reshape(tb, seq, dp).astype(jnp.bfloat16)
    v = qkv[:, 2 * dp:].reshape(tb, seq, dp).astype(jnp.bfloat16)
    scores = jnp.einsum("bqd,bkd->bqk", q, k,
                        preferred_element_type=jnp.float32)      # scale pre-folded
    scores = scores - jnp.max(scores, axis=-1, keepdims=True)
    p = jnp.exp(scores)
    p = p * pl.reciprocal(jnp.sum(p, axis=-1, keepdims=True), approx=True)
    attn = jnp.einsum("bqk,bkd->bqd", p.astype(jnp.bfloat16), v,
                      preferred_element_type=jnp.float32)        # (tb, s, dp)
    h = h + jnp.dot(attn.reshape(tm, dp).astype(jnp.bfloat16), wo_ref[...],
                    preferred_element_type=jnp.float32)

    # ---- MLP (pre-LN, ReLU) ----
    x2 = ln(h).astype(jnp.bfloat16)
    f = jnp.dot(x2, w1_ref[...], preferred_element_type=jnp.float32)
    f = jnp.maximum(f, 0.0).astype(jnp.bfloat16)
    h = h + jnp.dot(f, w2_ref[...], preferred_element_type=jnp.float32)

    # ---- final LN + logits (kept in VMEM, never written to HBM) ----
    logits = jnp.dot(ln(h).astype(jnp.bfloat16), wout_ref[...],
                     preferred_element_type=jnp.float32)         # (tm, vp)

    # ---- fused masked cross-entropy: per-tile partial sums ----
    vid = lax.broadcasted_iota(jnp.int32, (tm, vp), 1)
    logits = jnp.where(vid < v_real, logits, -1e30)              # mask padded vocab
    m = jnp.max(logits, axis=-1, keepdims=True)
    lse = jnp.log(jnp.sum(jnp.exp(logits - m), axis=-1, keepdims=True)) + m
    picked = jnp.sum(jnp.where(vid == tgt_ref[...], logits, 0.0),
                     axis=-1, keepdims=True)                     # (tm, 1)
    tok_logp = picked - lse                                      # narrow subtract
    msk = msk_ref[...]                                           # (tm, 1) f32
    sum_loss = jnp.sum(-tok_logp * msk)
    sum_msk = jnp.sum(msk)

    # Per-tile partials written into one lane-dense (1,8,128) tile (unmasked vst).
    # TODO(synk): an SMEM (1,2) blocked output would avoid the padded tile; kept
    # VMEM here for a proven lowering path (cost is one 4 KiB store per tile).
    r = lax.broadcasted_iota(jnp.int32, (1, 8, 128), 1)
    c = lax.broadcasted_iota(jnp.int32, (1, 8, 128), 2)
    part_ref[...] = (jnp.where((r == 0) & (c == 0), sum_loss, 0.0)
                     + jnp.where((r == 0) & (c == 1), sum_msk, 0.0))


# ----------------------------------------------------------------------------
# pallas_call wrapper: row grid, resident weights, parallel semantics
# ----------------------------------------------------------------------------
def maskgit_forward_loss(ids, tgt, msk, params, *, d_real, v_real, batch, seq,
                         tb=None):
    """ids/tgt: (B*S, 1) int32, msk: (B*S, 1) f32. Returns scalar masked CE."""
    tok_emb, pos_emb = params["token_emb"], params["pos_emb"]
    wqkv, wo, w1, w2, wout = (params[k] for k in ("wqkv", "wo", "w1", "w2", "wout"))
    dp = tok_emb.shape[-1]
    vemb_p = tok_emb.shape[0]
    fp = w1.shape[-1]
    vp = wout.shape[-1]

    if tb is None:
        # target ~256 MXU rows per tile (128 on v5e would also be fine)
        tb = max(1, min(batch, 256 // seq))
        while batch % tb:
            tb -= 1
    assert batch % tb == 0
    num_tiles = batch // tb
    tm = tb * seq

    kernel = functools.partial(_maskgit_block_kernel, d_real=d_real,
                               v_real=v_real, tb=tb, seq=seq)

    row_spec = pl.BlockSpec((tm, 1), lambda i: (i, 0))           # ids / tgt / msk

    def const(arr):                                              # VMEM-resident weight
        return pl.BlockSpec(arr.shape, lambda i: (0, 0))

    # Advisory cost estimate + explicit VMEM budget.
    weight_bytes = sum(int(a.size) * a.dtype.itemsize
                       for a in (tok_emb, pos_emb, wqkv, wo, w1, w2, wout))
    bs = batch * seq
    flops = 2 * bs * dp * (vemb_p + 3 * dp + dp + 2 * fp + vp) + 4 * batch * seq * seq * dp
    transc = bs * (seq + vp)
    bytes_acc = weight_bytes + bs * 12 + num_tiles * 8 * 128 * 4
    vmem_budget = (weight_bytes
                   + 6 * tm * 4                      # double-buffered ids/tgt/msk
                   + 4 * tm * dp * 4                 # residual / LN temps
                   + 2 * tm * 3 * dp * 4             # qkv
                   + 2 * tm * max(fp, vp) * 4        # mlp hidden / logits (+exp temp)
                   + 2 * tb * seq * seq * 4)         # attention scores
    vmem_limit = int(min(max(2 * vmem_budget, 16 * 1024 * 1024), 64 * 1024 * 1024))

    partials = pl.pallas_call(
        kernel,
        out_shape=jax.ShapeDtypeStruct((num_tiles, 8, 128), jnp.float32),
        grid_spec=pltpu.PrefetchScalarGridSpec(
            num_scalar_prefetch=0,
            grid=(num_tiles,),
            in_specs=[row_spec, row_spec, row_spec,
                      const(tok_emb), const(pos_emb),
                      const(wqkv), const(wo), const(w1), const(w2), const(wout)],
            out_specs=pl.BlockSpec((1, 8, 128), lambda i: (i, 0, 0)),
        ),
        compiler_params=pltpu.CompilerParams(
            dimension_semantics=("parallel",),       # megacore-shardable on v7x
            vmem_limit_bytes=vmem_limit),
        cost_estimate=pl.CostEstimate(flops=int(flops),
                                      transcendentals=int(transc),
                                      bytes_accessed=int(bytes_acc)),
    )(ids, tgt, msk, tok_emb, pos_emb, wqkv, wo, w1, w2, wout)

    # Reduce per-tile partials in JAX (keeps the grid axis legally parallel).
    return jnp.sum(partials[:, 0, 0]) / jnp.sum(partials[:, 0, 1])


# ----------------------------------------------------------------------------
# MaskGitTrainWrapper.forward equivalent (fully traceable / jittable)
# ----------------------------------------------------------------------------
def maskgit_train_wrapper_forward(x, key, params, *, steps, mask_id, dim, vocab,
                                  tb=None):
    """x: (B, S) int32 token ids in [0, vocab). Returns scalar loss."""
    B, S = x.shape
    k_step, k_noise = jax.random.split(key)

    # rand_step = randint(0, steps); num_tokens_mask = round(S*cos(...)).clamp(min=1)
    # Kept as traced scalars -> no host sync, no per-step recompiles.
    rand_step = jax.random.randint(k_step, (), 0, steps)
    num_mask = jnp.clip(
        jnp.round(S * jnp.cos(rand_step.astype(jnp.float32)
                              * (math.pi * 0.5 / steps))).astype(jnp.int32),
        1, S)

    # topk-of-noise mask via single top_k + threshold compare (== randn().topk()
    # .scatter() as bool for continuous noise; replaces the double argsort).
    noise = jax.random.normal(k_noise, (B, S), dtype=jnp.float32)
    sorted_desc, _ = lax.top_k(noise, S)
    thresh = lax.dynamic_index_in_dim(sorted_desc, num_mask - 1, axis=1,
                                      keepdims=True)             # (B, 1)
    mask = noise >= thresh                                       # (B, S) bool

    masked_input = jnp.where(mask, jnp.int32(mask_id), x)

    ids = masked_input.reshape(B * S, 1).astype(jnp.int32)
    tgt = x.reshape(B * S, 1).astype(jnp.int32)
    msk = mask.reshape(B * S, 1).astype(jnp.float32)

    return maskgit_forward_loss(ids, tgt, msk, params, d_real=dim, v_real=vocab,
                                batch=B, seq=S, tb=tb)


# ----------------------------------------------------------------------------
# Deterministic parameter construction (raw weights, then zero-pad + fuse)
# ----------------------------------------------------------------------------
def make_params(num_tokens, seq, dim, ffn_dim, dp, vp):
    keys = jax.random.split(jax.random.PRNGKey(42), 9)
    s = 0.02

    def rnd(k, shape):
        return s * jax.random.normal(k, shape, jnp.float32)

    tok = rnd(keys[0], (num_tokens + 1, dim))        # +1 row for the mask token
    pos = rnd(keys[1], (seq, dim))
    wq, wk, wv, wo = (rnd(keys[i], (dim, dim)) for i in range(2, 6))
    w1 = rnd(keys[6], (dim, ffn_dim))
    w2 = rnd(keys[7], (ffn_dim, dim))
    wout = rnd(keys[8], (dim, num_tokens))

    wq = wq / math.sqrt(dim)                          # fold attention scale into Wq

    def pad2(w, r, c):
        return jnp.zeros((r, c), jnp.float32).at[:w.shape[0], :w.shape[1]].set(w)

    fp = ((ffn_dim + 127) // 128) * 128
    vemb_p = ((num_tokens + 1 + 127) // 128) * 128
    return {
        "token_emb": pad2(tok, vemb_p, dp).astype(jnp.bfloat16),   # gathered in-kernel via one-hot MXU
        "pos_emb":   pad2(pos, seq, dp),                           # f32, added onto f32 residual
        "wqkv": jnp.concatenate([pad2(wq, dp, dp), pad2(wk, dp, dp),
                                 pad2(wv, dp, dp)], axis=1).astype(jnp.bfloat16),
        "wo":   pad2(wo, dp, dp).astype(jnp.bfloat16),
        "w1":   pad2(w1, dp, fp).astype(jnp.bfloat16),
        "w2":   pad2(w2, fp, dp).astype(jnp.bfloat16),
        "wout": pad2(wout, dp, vp).astype(jnp.bfloat16),
    }


if __name__ == "__main__":
    B, S, D, FFN = 2, 8, 32, 128
    NUM_TOKENS = 32
    MASK_ID = NUM_TOKENS                    # extra embedding row for the mask token
    STEPS = 10
    DP = ((D + 127) // 128) * 128           # lane-dense feature dim  (=128)
    VP = ((NUM_TOKENS + 127) // 128) * 128  # lane-dense vocab dim    (=128)

    params = make_params(NUM_TOKENS, S, D, FFN, DP, VP)

    key = jax.random.PRNGKey(0)
    k_x, k_fwd = jax.random.split(key)
    x = jax.random.randint(k_x, (B, S), 0, NUM_TOKENS, dtype=jnp.int32)

    # tb=1 -> grid=(2,): exercises the row grid / resident-weight / partial-loss
    # path (and megacore sharding on v7x) even at these toy shapes.
    fwd = jax.jit(functools.partial(maskgit_train_wrapper_forward,
                                    steps=STEPS, mask_id=MASK_ID,
                                    dim=D, vocab=NUM_TOKENS, tb=1))
    loss = jax.block_until_ready(fwd(x, k_fwd, params))
    assert jnp.isfinite(loss), f"non-finite loss: {loss}"
    print("KERNEL_OK")
</pallas_src>

<mosaic_0001>
module attributes {stable_mosaic.version = 11 : i64} {
  func.func @_maskgit_block_kernel(%arg0: i32, %arg1: memref<8x1xi32, #tpu.memory_space<vmem>>, %arg2: memref<8x1xi32, #tpu.memory_space<vmem>>, %arg3: memref<8x1xf32, #tpu.memory_space<vmem>>, %arg4: memref<128x128xbf16, #tpu.memory_space<vmem>>, %arg5: memref<8x128xf32, #tpu.memory_space<vmem>>, %arg6: memref<128x384xbf16, #tpu.memory_space<vmem>>, %arg7: memref<128x128xbf16, #tpu.memory_space<vmem>>, %arg8: memref<128x128xbf16, #tpu.memory_space<vmem>>, %arg9: memref<128x128xbf16, #tpu.memory_space<vmem>>, %arg10: memref<128x128xbf16, #tpu.memory_space<vmem>>, %arg11: memref<1x8x128xf32, #tpu.memory_space<vmem>>) attributes {dimension_semantics = [#tpu.dimension_semantics<parallel>], iteration_bounds = array<i64: 2>, scalar_prefetch = 0 : i64, scratch_operands = 0 : i64, tpu.core_type = #tpu.core_type<tc>, window_params = [{transform_indices = @transform_0, window_bounds = array<i64: 8, 1>}, {transform_indices = @transform_1, window_bounds = array<i64: 8, 1>}, {transform_indices = @transform_2, window_bounds = array<i64: 8, 1>}, {pipeline_mode = #tpu.pipeline_mode<synchronous>, transform_indices = @transform_3, window_bounds = array<i64: 128, 128>}, {pipeline_mode = #tpu.pipeline_mode<synchronous>, transform_indices = @transform_4, window_bounds = array<i64: 8, 128>}, {pipeline_mode = #tpu.pipeline_mode<synchronous>, transform_indices = @transform_5, window_bounds = array<i64: 128, 384>}, {pipeline_mode = #tpu.pipeline_mode<synchronous>, transform_indices = @transform_6, window_bounds = array<i64: 128, 128>}, {pipeline_mode = #tpu.pipeline_mode<synchronous>, transform_indices = @transform_7, window_bounds = array<i64: 128, 128>}, {pipeline_mode = #tpu.pipeline_mode<synchronous>, transform_indices = @transform_8, window_bounds = array<i64: 128, 128>}, {pipeline_mode = #tpu.pipeline_mode<synchronous>, transform_indices = @transform_9, window_bounds = array<i64: 128, 128>}, {transform_indices = @transform_10, window_bounds = array<i64: 1, 8, 128>}]} {
    %c0 = arith.constant 0 : index
    %c0_0 = arith.constant 0 : index
    %0 = vector.load %arg1[%c0, %c0_0] : memref<8x1xi32, #tpu.memory_space<vmem>>, vector<8x1xi32>
    %1 = tpu.iota {dimensions = array<i32: 1>} : vector<8x128xi32>
    %2 = vector.broadcast %0 : vector<8x1xi32> to vector<8x128xi32>
    %3 = arith.cmpi eq, %1, %2 : vector<8x128xi32>
    %4 = arith.extui %3 : vector<8x128xi1> to vector<8x128xi32>
    %5 = arith.sitofp %4 : vector<8x128xi32> to vector<8x128xf32>
    %6 = arith.truncf %5 : vector<8x128xf32> to vector<8x128xbf16>
    %c0_1 = arith.constant 0 : index
    %c0_2 = arith.constant 0 : index
    %7 = vector.load %arg4[%c0_1, %c0_2] : memref<128x128xbf16, #tpu.memory_space<vmem>>, vector<128x128xbf16>
    %cst = arith.constant dense<0.000000e+00> : vector<8x128xf32>
    %8 = tpu.matmul %6, %7, %cst {dimension_numbers = #tpu.dot_dimension_numbers<[1], [0], [0], [1], [0, 0, 1, 1], [], []>} : vector<8x128xbf16>, vector<128x128xbf16>, vector<8x128xf32> -> vector<8x128xf32>
    %9 = vector.shape_cast %8 : vector<8x128xf32> to vector<1x8x128xf32>
    %c0_3 = arith.constant 0 : index
    %c0_4 = arith.constant 0 : index
    %10 = vector.load %arg5[%c0_3, %c0_4] : memref<8x128xf32, #tpu.memory_space<vmem>>, vector<8x128xf32>
    %11 = vector.shape_cast %10 : vector<8x128xf32> to vector<1x8x128xf32>
    %12 = arith.addf %9, %11 : vector<1x8x128xf32>
    %13 = vector.shape_cast %12 : vector<1x8x128xf32> to vector<8x128xf32>
    %cst_5 = arith.constant dense<0.000000e+00> : vector<8xf32>
    %14 = vector.multi_reduction <add>, %13, %cst_5 [1] : vector<8x128xf32> to vector<8xf32>
    %15 = vector.shape_cast %14 : vector<8xf32> to vector<8x1xf32>
    %cst_6 = arith.constant 3.125000e-02 : f32
    %16 = vector.broadcast %cst_6 : f32 to vector<8x1xf32>
    %17 = arith.mulf %15, %16 : vector<8x1xf32>
    %18 = arith.mulf %13, %13 : vector<8x128xf32>
    %cst_7 = arith.constant dense<0.000000e+00> : vector<8xf32>
    %19 = vector.multi_reduction <add>, %18, %cst_7 [1] : vector<8x128xf32> to vector<8xf32>
    %20 = vector.shape_cast %19 : vector<8xf32> to vector<8x1xf32>
    %cst_8 = arith.constant 3.125000e-02 : f32
    %21 = vector.broadcast %cst_8 : f32 to vector<8x1xf32>
    %22 = arith.mulf %20, %21 : vector<8x1xf32>
    %23 = arith.mulf %17, %17 : vector<8x1xf32>
    %24 = arith.subf %22, %23 : vector<8x1xf32>
    %cst_9 = arith.constant 0.000000e+00 : f32
    %25 = vector.broadcast %cst_9 : f32 to vector<8x1xf32>
    %26 = arith.maximumf %24, %25 : vector<8x1xf32>
    %27 = vector.broadcast %17 : vector<8x1xf32> to vector<8x128xf32>
    %28 = arith.subf %13, %27 : vector<8x128xf32>
    %cst_10 = arith.constant 9.99999974E-6 : f32
    %29 = vector.broadcast %cst_10 : f32 to vector<8x1xf32>
    %30 = arith.addf %26, %29 : vector<8x1xf32>
    %31 = math.rsqrt %30 : vector<8x1xf32>
    %32 = vector.broadcast %31 : vector<8x1xf32> to vector<8x128xf32>
    %33 = arith.mulf %28, %32 : vector<8x128xf32>
    %34 = arith.truncf %33 : vector<8x128xf32> to vector<8x128xbf16>
    %c0_11 = arith.constant 0 : index
    %c0_12 = arith.constant 0 : index
    %35 = vector.load %arg6[%c0_11, %c0_12] : memref<128x384xbf16, #tpu.memory_space<vmem>>, vector<128x384xbf16>
    %cst_13 = arith.constant dense<0.000000e+00> : vector<8x384xf32>
    %36 = tpu.matmul %34, %35, %cst_13 {dimension_numbers = #tpu.dot_dimension_numbers<[1], [0], [0], [1], [0, 0, 1, 1], [], []>} : vector<8x128xbf16>, vector<128x384xbf16>, vector<8x384xf32> -> vector<8x384xf32>
    %37 = vector.extract_strided_slice %36 {offsets = [0, 0], sizes = [8, 128], strides = [1, 1]} : vector<8x384xf32> to vector<8x128xf32>
    %38 = vector.shape_cast %37 : vector<8x128xf32> to vector<1x8x128xf32>
    %39 = arith.truncf %38 : vector<1x8x128xf32> to vector<1x8x128xbf16>
    %40 = vector.extract_strided_slice %36 {offsets = [0, 128], sizes = [8, 128], strides = [1, 1]} : vector<8x384xf32> to vector<8x128xf32>
    %41 = vector.shape_cast %40 : vector<8x128xf32> to vector<1x8x128xf32>
    %42 = arith.truncf %41 : vector<1x8x128xf32> to vector<1x8x128xbf16>
    %43 = vector.extract_strided_slice %36 {offsets = [0, 256], sizes = [8, 128], strides = [1, 1]} : vector<8x384xf32> to vector<8x128xf32>
    %44 = vector.shape_cast %43 : vector<8x128xf32> to vector<1x8x128xf32>
    %45 = arith.truncf %44 : vector<1x8x128xf32> to vector<1x8x128xbf16>
    "tpu.trace_start"() <{level = 10 : i32, message = "bqd,bkd->bqk"}> : () -> ()
    %cst_14 = arith.constant dense<0.000000e+00> : vector<1x8x8xf32>
    %46 = tpu.matmul %39, %42, %cst_14 {dimension_numbers = #tpu.dot_dimension_numbers<[2], [2], [1], [1], [0, 0, 0, 1, 1, 1], [0], [0]>} : vector<1x8x128xbf16>, vector<1x8x128xbf16>, vector<1x8x8xf32> -> vector<1x8x8xf32>
    "tpu.trace_stop"() : () -> ()
    %cst_15 = arith.constant dense<0xFF800000> : vector<1x8xf32>
    %47 = vector.multi_reduction <maximumf>, %46, %cst_15 [2] : vector<1x8x8xf32> to vector<1x8xf32>
    %48 = vector.shape_cast %47 : vector<1x8xf32> to vector<1x8x1xf32>
    %49 = vector.broadcast %48 : vector<1x8x1xf32> to vector<1x8x8xf32>
    %50 = arith.subf %46, %49 : vector<1x8x8xf32>
    %51 = math.exp %50 : vector<1x8x8xf32>
    %cst_16 = arith.constant dense<0.000000e+00> : vector<1x8xf32>
    %52 = vector.multi_reduction <add>, %51, %cst_16 [2] : vector<1x8x8xf32> to vector<1x8xf32>
    %53 = vector.shape_cast %52 : vector<1x8xf32> to vector<1x8x1xf32>
    %54 = tpu.reciprocal %53 {approx = true} : vector<1x8x1xf32> -> vector<1x8x1xf32>
    %55 = vector.broadcast %54 : vector<1x8x1xf32> to vector<1x8x8xf32>
    %56 = arith.mulf %51, %55 : vector<1x8x8xf32>
    %57 = arith.truncf %56 : vector<1x8x8xf32> to vector<1x8x8xbf16>
    "tpu.trace_start"() <{level = 10 : i32, message = "bqk,bkd->bqd"}> : () -> ()
    %cst_17 = arith.constant dense<0.000000e+00> : vector<1x8x128xf32>
    %58 = tpu.matmul %57, %45, %cst_17 {dimension_numbers = #tpu.dot_dimension_numbers<[2], [1], [1], [2], [0, 0, 0, 1, 1, 2], [0], [0]>} : vector<1x8x8xbf16>, vector<1x8x128xbf16>, vector<1x8x128xf32> -> vector<1x8x128xf32>
    "tpu.trace_stop"() : () -> ()
    %59 = vector.shape_cast %58 : vector<1x8x128xf32> to vector<8x128xf32>
    %60 = arith.truncf %59 : vector<8x128xf32> to vector<8x128xbf16>
    %c0_18 = arith.constant 0 : index
    %c0_19 = arith.constant 0 : index
    %61 = vector.load %arg7[%c0_18, %c0_19] : memref<128x128xbf16, #tpu.memory_space<vmem>>, vector<128x128xbf16>
    %cst_20 = arith.constant dense<0.000000e+00> : vector<8x128xf32>
    %62 = tpu.matmul %60, %61, %cst_20 {dimension_numbers = #tpu.dot_dimension_numbers<[1], [0], [0], [1], [0, 0, 1, 1], [], []>} : vector<8x128xbf16>, vector<128x128xbf16>, vector<8x128xf32> -> vector<8x128xf32>
    %63 = arith.addf %13, %62 : vector<8x128xf32>
    %cst_21 = arith.constant dense<0.000000e+00> : vector<8xf32>
    %64 = vector.multi_reduction <add>, %63, %cst_21 [1] : vector<8x128xf32> to vector<8xf32>
    %65 = vector.shape_cast %64 : vector<8xf32> to vector<8x1xf32>
    %cst_22 = arith.constant 3.125000e-02 : f32
    %66 = vector.broadcast %cst_22 : f32 to vector<8x1xf32>
    %67 = arith.mulf %65, %66 : vector<8x1xf32>
    %68 = arith.mulf %63, %63 : vector<8x128xf32>
    %cst_23 = arith.constant dense<0.000000e+00> : vector<8xf32>
    %69 = vector.multi_reduction <add>, %68, %cst_23 [1] : vector<8x128xf32> to vector<8xf32>
    %70 = vector.shape_cast %69 : vector<8xf32> to vector<8x1xf32>
    %cst_24 = arith.constant 3.125000e-02 : f32
    %71 = vector.broadcast %cst_24 : f32 to vector<8x1xf32>
    %72 = arith.mulf %70, %71 : vector<8x1xf32>
    %73 = arith.mulf %67, %67 : vector<8x1xf32>
    %74 = arith.subf %72, %73 : vector<8x1xf32>
    %cst_25 = arith.constant 0.000000e+00 : f32
    %75 = vector.broadcast %cst_25 : f32 to vector<8x1xf32>
    %76 = arith.maximumf %74, %75 : vector<8x1xf32>
    %77 = vector.broadcast %67 : vector<8x1xf32> to vector<8x128xf32>
    %78 = arith.subf %63, %77 : vector<8x128xf32>
    %cst_26 = arith.constant 9.99999974E-6 : f32
    %79 = vector.broadcast %cst_26 : f32 to vector<8x1xf32>
    %80 = arith.addf %76, %79 : vector<8x1xf32>
    %81 = math.rsqrt %80 : vector<8x1xf32>
    %82 = vector.broadcast %81 : vector<8x1xf32> to vector<8x128xf32>
    %83 = arith.mulf %78, %82 : vector<8x128xf32>
    %84 = arith.truncf %83 : vector<8x128xf32> to vector<8x128xbf16>
    %c0_27 = arith.constant 0 : index
    %c0_28 = arith.constant 0 : index
    %85 = vector.load %arg8[%c0_27, %c0_28] : memref<128x128xbf16, #tpu.memory_space<vmem>>, vector<128x128xbf16>
    %cst_29 = arith.constant dense<0.000000e+00> : vector<8x128xf32>
    %86 = tpu.matmul %84, %85, %cst_29 {dimension_numbers = #tpu.dot_dimension_numbers<[1], [0], [0], [1], [0, 0, 1, 1], [], []>} : vector<8x128xbf16>, vector<128x128xbf16>, vector<8x128xf32> -> vector<8x128xf32>
    %cst_30 = arith.constant 0.000000e+00 : f32
    %87 = vector.broadcast %cst_30 : f32 to vector<8x128xf32>
    %88 = arith.maximumf %86, %87 : vector<8x128xf32>
    %89 = arith.truncf %88 : vector<8x128xf32> to vector<8x128xbf16>
    %c0_31 = arith.constant 0 : index
    %c0_32 = arith.constant 0 : index
    %90 = vector.load %arg9[%c0_31, %c0_32] : memref<128x128xbf16, #tpu.memory_space<vmem>>, vector<128x128xbf16>
    %cst_33 = arith.constant dense<0.000000e+00> : vector<8x128xf32>
    %91 = tpu.matmul %89, %90, %cst_33 {dimension_numbers = #tpu.dot_dimension_numbers<[1], [0], [0], [1], [0, 0, 1, 1], [], []>} : vector<8x128xbf16>, vector<128x128xbf16>, vector<8x128xf32> -> vector<8x128xf32>
    %92 = arith.addf %63, %91 : vector<8x128xf32>
    %cst_34 = arith.constant dense<0.000000e+00> : vector<8xf32>
    %93 = vector.multi_reduction <add>, %92, %cst_34 [1] : vector<8x128xf32> to vector<8xf32>
    %94 = vector.shape_cast %93 : vector<8xf32> to vector<8x1xf32>
    %cst_35 = arith.constant 3.125000e-02 : f32
    %95 = vector.broadcast %cst_35 : f32 to vector<8x1xf32>
    %96 = arith.mulf %94, %95 : vector<8x1xf32>
    %97 = arith.mulf %92, %92 : vector<8x128xf32>
    %cst_36 = arith.constant dense<0.000000e+00> : vector<8xf32>
    %98 = vector.multi_reduction <add>, %97, %cst_36 [1] : vector<8x128xf32> to vector<8xf32>
    %99 = vector.shape_cast %98 : vector<8xf32> to vector<8x1xf32>
    %cst_37 = arith.constant 3.125000e-02 : f32
    %100 = vector.broadcast %cst_37 : f32 to vector<8x1xf32>
    %101 = arith.mulf %99, %100 : vector<8x1xf32>
    %102 = arith.mulf %96, %96 : vector<8x1xf32>
    %103 = arith.subf %101, %102 : vector<8x1xf32>
    %cst_38 = arith.constant 0.000000e+00 : f32
    %104 = vector.broadcast %cst_38 : f32 to vector<8x1xf32>
    %105 = arith.maximumf %103, %104 : vector<8x1xf32>
    %106 = vector.broadcast %96 : vector<8x1xf32> to vector<8x128xf32>
    %107 = arith.subf %92, %106 : vector<8x128xf32>
    %cst_39 = arith.constant 9.99999974E-6 : f32
    %108 = vector.broadcast %cst_39 : f32 to vector<8x1xf32>
    %109 = arith.addf %105, %108 : vector<8x1xf32>
    %110 = math.rsqrt %109 : vector<8x1xf32>
    %111 = vector.broadcast %110 : vector<8x1xf32> to vector<8x128xf32>
    %112 = arith.mulf %107, %111 : vector<8x128xf32>
    %113 = arith.truncf %112 : vector<8x128xf32> to vector<8x128xbf16>
    %c0_40 = arith.constant 0 : index
    %c0_41 = arith.constant 0 : index
    %114 = vector.load %arg10[%c0_40, %c0_41] : memref<128x128xbf16, #tpu.memory_space<vmem>>, vector<128x128xbf16>
    %cst_42 = arith.constant dense<0.000000e+00> : vector<8x128xf32>
    %115 = tpu.matmul %113, %114, %cst_42 {dimension_numbers = #tpu.dot_dimension_numbers<[1], [0], [0], [1], [0, 0, 1, 1], [], []>} : vector<8x128xbf16>, vector<128x128xbf16>, vector<8x128xf32> -> vector<8x128xf32>
    %116 = tpu.iota {dimensions = array<i32: 1>} : vector<8x128xi32>
    %c32_i32 = arith.constant 32 : i32
    %117 = vector.broadcast %c32_i32 : i32 to vector<8x128xi32>
    %118 = arith.cmpi slt, %116, %117 : vector<8x128xi32>
    %cst_43 = arith.constant -1.000000e+30 : f32
    %119 = vector.broadcast %cst_43 : f32 to vector<8x128xf32>
    %120 = arith.select %118, %115, %119 : vector<8x128xi1>, vector<8x128xf32>
    %cst_44 = arith.constant dense<0xFF800000> : vector<8xf32>
    %121 = vector.multi_reduction <maximumf>, %120, %cst_44 [1] : vector<8x128xf32> to vector<8xf32>
    %122 = vector.shape_cast %121 : vector<8xf32> to vector<8x1xf32>
    %123 = vector.broadcast %122 : vector<8x1xf32> to vector<8x128xf32>
    %124 = arith.subf %120, %123 : vector<8x128xf32>
    %125 = math.exp %124 : vector<8x128xf32>
    %cst_45 = arith.constant dense<0.000000e+00> : vector<8xf32>
    %126 = vector.multi_reduction <add>, %125, %cst_45 [1] : vector<8x128xf32> to vector<8xf32>
    %127 = vector.shape_cast %126 : vector<8xf32> to vector<8x1xf32>
    %128 = math.log %127 : vector<8x1xf32>
    %129 = arith.addf %128, %122 : vector<8x1xf32>
    %c0_46 = arith.constant 0 : index
    %c0_47 = arith.constant 0 : index
    %130 = vector.load %arg2[%c0_46, %c0_47] : memref<8x1xi32, #tpu.memory_space<vmem>>, vector<8x1xi32>
    %131 = vector.broadcast %130 : vector<8x1xi32> to vector<8x128xi32>
    %132 = arith.cmpi eq, %116, %131 : vector<8x128xi32>
    %cst_48 = arith.constant 0.000000e+00 : f32
    %133 = vector.broadcast %cst_48 : f32 to vector<8x128xf32>
    %134 = arith.select %132, %120, %133 : vector<8x128xi1>, vector<8x128xf32>
    %cst_49 = arith.constant dense<0.000000e+00> : vector<8xf32>
    %135 = vector.multi_reduction <add>, %134, %cst_49 [1] : vector<8x128xf32> to vector<8xf32>
    %136 = vector.shape_cast %135 : vector<8xf32> to vector<8x1xf32>
    %137 = arith.subf %136, %129 : vector<8x1xf32>
    %c0_50 = arith.constant 0 : index
    %c0_51 = arith.constant 0 : index
    %138 = vector.load %arg3[%c0_50, %c0_51] : memref<8x1xf32, #tpu.memory_space<vmem>>, vector<8x1xf32>
    %cst_52 = arith.constant 0.000000e+00 : f32
    %139 = vector.broadcast %cst_52 : f32 to vector<8x1xf32>
    %140 = arith.subf %139, %137 : vector<8x1xf32>
    %141 = arith.mulf %140, %138 : vector<8x1xf32>
    %142 = vector.shape_cast %141 : vector<8x1xf32> to vector<1x8x1xf32>
    %cst_53 = arith.constant dense<0.000000e+00> : vector<1xf32>
    %143 = vector.multi_reduction <add>, %142, %cst_53 [1, 2] : vector<1x8x1xf32> to vector<1xf32>
    %144 = vector.shape_cast %143 : vector<1xf32> to vector<1x1x1xf32>
    %145 = vector.extract %144[0, 0, 0] : f32 from vector<1x1x1xf32>
    %146 = vector.shape_cast %138 : vector<8x1xf32> to vector<1x8x1xf32>
    %cst_54 = arith.constant dense<0.000000e+00> : vector<1xf32>
    %147 = vector.multi_reduction <add>, %146, %cst_54 [1, 2] : vector<1x8x1xf32> to vector<1xf32>
    %148 = vector.shape_cast %147 : vector<1xf32> to vector<1x1x1xf32>
    %149 = vector.extract %148[0, 0, 0] : f32 from vector<1x1x1xf32>
    %150 = tpu.iota {dimensions = array<i32: 1>} : vector<1x8x128xi32>
    %151 = tpu.iota {dimensions = array<i32: 2>} : vector<1x8x128xi32>
    %c0_i32 = arith.constant 0 : i32
    %152 = vector.broadcast %c0_i32 : i32 to vector<1x8x128xi32>
    %153 = arith.cmpi eq, %150, %152 : vector<1x8x128xi32>
    %c0_i32_55 = arith.constant 0 : i32
    %154 = vector.broadcast %c0_i32_55 : i32 to vector<1x8x128xi32>
    %155 = arith.cmpi eq, %151, %154 : vector<1x8x128xi32>
    %156 = arith.andi %153, %155 : vector<1x8x128xi1>
    %cst_56 = arith.constant 0.000000e+00 : f32
    %157 = vector.broadcast %145 : f32 to vector<1x8x128xf32>
    %158 = vector.broadcast %cst_56 : f32 to vector<1x8x128xf32>
    %159 = arith.select %156, %157, %158 : vector<1x8x128xi1>, vector<1x8x128xf32>
    %c0_i32_57 = arith.constant 0 : i32
    %160 = vector.broadcast %c0_i32_57 : i32 to vector<1x8x128xi32>
    %161 = arith.cmpi eq, %150, %160 : vector<1x8x128xi32>
    %c1_i32 = arith.constant 1 : i32
    %162 = vector.broadcast %c1_i32 : i32 to vector<1x8x128xi32>
    %163 = arith.cmpi eq, %151, %162 : vector<1x8x128xi32>
    %164 = arith.andi %161, %163 : vector<1x8x128xi1>
    %cst_58 = arith.constant 0.000000e+00 : f32
    %165 = vector.broadcast %149 : f32 to vector<1x8x128xf32>
    %166 = vector.broadcast %cst_58 : f32 to vector<1x8x128xf32>
    %167 = arith.select %164, %165, %166 : vector<1x8x128xi1>, vector<1x8x128xf32>
    %168 = arith.addf %159, %167 : vector<1x8x128xf32>
    %c0_59 = arith.constant 0 : index
    %c0_60 = arith.constant 0 : index
    %c0_61 = arith.constant 0 : index
    %169 = vector.load %arg11[%c0_59, %c0_60, %c0_61] : memref<1x8x128xf32, #tpu.memory_space<vmem>>, vector<1x8x128xf32>
    tpu.vector_store %arg11[%c0_59, %c0_60, %c0_61], %168 {strides = array<i32>} : memref<1x8x128xf32, #tpu.memory_space<vmem>>, vector<1x8x128xf32>,
    return
  }
  func.func @transform_0(%arg0: i32) -> (i32, i32) {
    %c0_i32 = arith.constant 0 : i32
    %c0_i32_0 = arith.constant 0 : i32
    return %arg0, %c0_i32 : i32, i32
  }
  func.func @transform_1(%arg0: i32) -> (i32, i32) {
    %c0_i32 = arith.constant 0 : i32
    %c0_i32_0 = arith.constant 0 : i32
    return %arg0, %c0_i32 : i32, i32
  }
  func.func @transform_2(%arg0: i32) -> (i32, i32) {
    %c0_i32 = arith.constant 0 : i32
    %c0_i32_0 = arith.constant 0 : i32
    return %arg0, %c0_i32 : i32, i32
  }
  func.func @transform_3(%arg0: i32) -> (i32, i32) {
    %c0_i32 = arith.constant 0 : i32
    %c0_i32_0 = arith.constant 0 : i32
    %c0_i32_1 = arith.constant 0 : i32
    return %c0_i32, %c0_i32_0 : i32, i32
  }
  func.func @transform_4(%arg0: i32) -> (i32, i32) {
    %c0_i32 = arith.constant 0 : i32
    %c0_i32_0 = arith.constant 0 : i32
    %c0_i32_1 = arith.constant 0 : i32
    return %c0_i32, %c0_i32_0 : i32, i32
  }
  func.func @transform_5(%arg0: i32) -> (i32, i32) {
    %c0_i32 = arith.constant 0 : i32
    %c0_i32_0 = arith.constant 0 : i32
    %c0_i32_1 = arith.constant 0 : i32
    return %c0_i32, %c0_i32_0 : i32, i32
  }
  func.func @transform_6(%arg0: i32) -> (i32, i32) {
    %c0_i32 = arith.constant 0 : i32
    %c0_i32_0 = arith.constant 0 : i32
    %c0_i32_1 = arith.constant 0 : i32
    return %c0_i32, %c0_i32_0 : i32, i32
  }
  func.func @transform_7(%arg0: i32) -> (i32, i32) {
    %c0_i32 = arith.constant 0 : i32
    %c0_i32_0 = arith.constant 0 : i32
    %c0_i32_1 = arith.constant 0 : i32
    return %c0_i32, %c0_i32_0 : i32, i32
  }
  func.func @transform_8(%arg0: i32) -> (i32, i32) {
    %c0_i32 = arith.constant 0 : i32
    %c0_i32_0 = arith.constant 0 : i32
    %c0_i32_1 = arith.constant 0 : i32
    return %c0_i32, %c0_i32_0 : i32, i32
  }
  func.func @transform_9(%arg0: i32) -> (i32, i32) {
    %c0_i32 = arith.constant 0 : i32
    %c0_i32_0 = arith.constant 0 : i32
    %c0_i32_1 = arith.constant 0 : i32
    return %c0_i32, %c0_i32_0 : i32, i32
  }
  func.func @transform_10(%arg0: i32) -> (i32, i32, i32) {
    %c0_i32 = arith.constant 0 : i32
    %c0_i32_0 = arith.constant 0 : i32
    %c0_i32_1 = arith.constant 0 : i32
    return %arg0, %c0_i32, %c0_i32_0 : i32, i32, i32
  }
}

</mosaic_0001>

<llo_original>
// kernel: ge.6
$region0: #{ge.6}
  #allocation0 [shape = 's32[1]{0}', space=sflag, size = 0x4, scoped, tag = 'scoped memory for ge.6']
  %s0 = inlined_call_operand.vmem [shape: f32[2], index: 0, kind: input, shape index: {}]
  %s1 = inlined_call_operand.vmem [shape: f32[2,8], index: 1, kind: output, shape index: {}]
  // Predicated region
  $region2: #{ge.6} parent=0 // pred_check
    _
  $region3: #{ge.6} parent=0 // pred_check_branch
    %3 = sbr.rel (0) target = $region5
  $region4: #{ge.6} parent=0 // pred_region
    _
  $region5: #{ge.6} parent=0 // pred_fallthru
    _
  %v4 = vld [vmem:[%s0] ss:$0 sm:$0xff]
  %6 = vbcast.lane.b32.xlu0 %v4, 256
  %v7 = vpop.permute.xlu0 %6
  %8 = vst [vmem:[%s1] sm:$0x3] %v7

// kernel: maskgit_train_wrapper_forward.1
$region0: #{maskgit_train_wrapper_forward.1}
  #allocation0 [shape = 'u32[]', space=smem, size = 0x4, offset = 0x4, fixed_abs, tag = 'smem constant byte address 0x4 - core index']
  #allocation1 [shape = 'u32[144,128]{1,0:T(1,128)}', space=vmem, size = 0x12000, scoped, tag = 'internal scratch']
  %s0 = inlined_call_operand.vmem [shape: s32[16,1], index: 0, kind: input, shape index: {}]
  %s1 = inlined_call_operand.vmem [shape: s32[16,1], index: 1, kind: input, shape index: {}]
  %s2 = inlined_call_operand.vmem [shape: f32[16,1], index: 2, kind: input, shape index: {}]
  %s3 = inlined_call_operand.vmem [shape: bf16[128,128], index: 3, kind: input, shape index: {}]
  %s4 = inlined_call_operand.vmem [shape: f32[8,128], index: 4, kind: input, shape index: {}]
  %s5 = inlined_call_operand.vmem [shape: bf16[128,384], index: 5, kind: input, shape index: {}]
  %s6 = inlined_call_operand.vmem [shape: bf16[128,128], index: 6, kind: input, shape index: {}]
  %s7 = inlined_call_operand.vmem [shape: bf16[128,128], index: 7, kind: input, shape index: {}]
  %s8 = inlined_call_operand.vmem [shape: bf16[128,128], index: 8, kind: input, shape index: {}]
  %s9 = inlined_call_operand.vmem [shape: bf16[128,128], index: 9, kind: input, shape index: {}]
  %s10 = inlined_call_operand.vmem [shape: f32[2,8,128], index: 10, kind: output, shape index: {}]
  %s11 = sld [smem:[#allocation0]]
  $region73: #{maskgit_train_wrapper_forward.1} parent=0
    _
  %s13 = ssub.s32 1, %s11
  %s14 = scalar_select 0, %s13, %s11
  loop: start=0, step=1, limit=4
  $region2: #{maskgit_train_wrapper_forward.1} parent=0 // loop_pre_header
    _
  $region3: #{maskgit_train_wrapper_forward.1} parent=0 // loop_header
    %s16 = sphi 0, %s20
    %p17 = scmp.ge.s32.totalorder %s16, 4
    %s26 = sphi 0, %s28
    %s29 = sphi 0, %s26
    %s30 = sphi 0, %s29
    %s46 = sphi 0, %s30
    %s52 = sphi 0, %s54
    %s55 = sphi 0, %s52
    %s56 = sphi 0, %s55
    %s72 = sphi 0, %s56
    %s78 = sphi 0, %s80
    %s81 = sphi 0, %s78
    %s82 = sphi 0, %s81
    %s98 = sphi 0, %s82
    %s102 = sphi 0, %s102
    %s104 = sphi 0, %s102
    %s105 = sphi 0, %s104
    %s119 = sphi 0, %s105
    %s123 = sphi 0, %s123
    %s125 = sphi 0, %s123
    %s126 = sphi 0, %s125
    %s140 = sphi 0, %s126
    %s144 = sphi 0, %s144
    %s146 = sphi 0, %s144
    %s147 = sphi 0, %s146
    %s161 = sphi 0, %s147
    %s165 = sphi 0, %s165
    %s167 = sphi 0, %s165
    %s168 = sphi 0, %s167
    %s182 = sphi 0, %s168
    %s186 = sphi 0, %s186
    %s188 = sphi 0, %s186
    %s189 = sphi 0, %s188
    %s203 = sphi 0, %s189
    %s207 = sphi 0, %s207
    %s209 = sphi 0, %s207
    %s210 = sphi 0, %s209
    %s224 = sphi 0, %s210
    %s228 = sphi 0, %s228
    %s230 = sphi 0, %s228
    %s231 = sphi 0, %s230
    %s245 = sphi 0, %s231
    %s251 = sphi 0, %s253
    %s254 = sphi 0, %s251
    %s255 = sphi 0, %s254
    %s271 = sphi 0, %s255
  $region4: #{maskgit_train_wrapper_forward.1} parent=0 // loop_header_branch
    %19 = sbr.rel (%p17) target = $region8
  $region5: #{maskgit_train_wrapper_forward.1} parent=0 // loop_body
    %s21 = ssub.s32 %s16, 1
    %s22 = ssub.s32 %s16, 2
    %s23 = sadd.s32 %s16, 1
    %s24 = ssub.s32 %s16, %s23
    %p25 = scmp.eq.s32.totalorder %s24, 0
    %s27 = sadd.s32 %s26, 1
    %s28 = scalar_select %p25, %s26, %s27
    %p31 = pneg %p25
    %p32 = scmp.eq.s32.totalorder %s16, 1
    %p33 = por %p31, %p32
    %p34 = scmp.ne.s32.totalorder %s26, %s29
    %p35 = scmp.eq.s32.totalorder %s16, 0
    %p36 = por %p34, %p35
    %p37 = scmp.ne.s32.totalorder %s26, %s29
    %p38 = scmp.eq.s32.totalorder %s21, 1
    %p39 = por %p37, %p38
    %p40 = scmp.ne.s32.totalorder %s29, %s30
    %p41 = scmp.eq.s32.totalorder %s21, 0
    %p42 = por %p40, %p41
    %p43 = scmp.ne.s32.totalorder %s29, %s30
    %p44 = scmp.eq.s32.totalorder %s22, 1
    %p45 = por %p43, %p44
    %p47 = scmp.ne.s32.totalorder %s30, %s46
    %p48 = scmp.eq.s32.totalorder %s22, 0
    %p49 = por %p47, %p48
    %s50 = ssub.s32 %s16, %s23
    %p51 = scmp.eq.s32.totalorder %s50, 0
    %s53 = sadd.s32 %s52, 1
    %s54 = scalar_select %p51, %s52, %s53
    %p57 = pneg %p51
    %p58 = scmp.eq.s32.totalorder %s16, 1
    %p59 = por %p57, %p58
    %p60 = scmp.ne.s32.totalorder %s52, %s55
    %p61 = scmp.eq.s32.totalorder %s16, 0
    %p62 = por %p60, %p61
    %p63 = scmp.ne.s32.totalorder %s52, %s55
    %p64 = scmp.eq.s32.totalorder %s21, 1
    %p65 = por %p63, %p64
    %p66 = scmp.ne.s32.totalorder %s55, %s56
    %p67 = scmp.eq.s32.totalorder %s21, 0
    %p68 = por %p66, %p67
    %p69 = scmp.ne.s32.totalorder %s55, %s56
    %p70 = scmp.eq.s32.totalorder %s22, 1
    %p71 = por %p69, %p70
    %p73 = scmp.ne.s32.totalorder %s56, %s72
    %p74 = scmp.eq.s32.totalorder %s22, 0
    %p75 = por %p73, %p74
    %s76 = ssub.s32 %s16, %s23
    %p77 = scmp.eq.s32.totalorder %s76, 0
    %s79 = sadd.s32 %s78, 1
    %s80 = scalar_select %p77, %s78, %s79
    %p83 = pneg %p77
    %p84 = scmp.eq.s32.totalorder %s16, 1
    %p85 = por %p83, %p84
    %p86 = scmp.ne.s32.totalorder %s78, %s81
    %p87 = scmp.eq.s32.totalorder %s16, 0
    %p88 = por %p86, %p87
    %p89 = scmp.ne.s32.totalorder %s78, %s81
    %p90 = scmp.eq.s32.totalorder %s21, 1
    %p91 = por %p89, %p90
    %p92 = scmp.ne.s32.totalorder %s81, %s82
    %p93 = scmp.eq.s32.totalorder %s21, 0
    %p94 = por %p92, %p93
    %p95 = scmp.ne.s32.totalorder %s81, %s82
    %p96 = scmp.eq.s32.totalorder %s22, 1
    %p97 = por %p95, %p96
    %p99 = scmp.ne.s32.totalorder %s82, %s98
    %p100 = scmp.eq.s32.totalorder %s22, 0
    %p101 = por %p99, %p100
    %s103 = sadd.s32 %s102, 1
    %p106 = scmp.eq.s32.totalorder %s16, 1
    %p107 = scmp.ne.s32.totalorder %s102, %s104
    %p108 = scmp.eq.s32.totalorder %s16, 0
    %p109 = por %p107, %p108
    %p110 = scmp.ne.s32.totalorder %s102, %s104
    %p111 = scmp.eq.s32.totalorder %s21, 1
    %p112 = por %p110, %p111
    %p113 = scmp.ne.s32.totalorder %s104, %s105
    %p114 = scmp.eq.s32.totalorder %s21, 0
    %p115 = por %p113, %p114
    %p116 = scmp.ne.s32.totalorder %s104, %s105
    %p117 = scmp.eq.s32.totalorder %s22, 1
    %p118 = por %p116, %p117
    %p120 = scmp.ne.s32.totalorder %s105, %s119
    %p121 = scmp.eq.s32.totalorder %s22, 0
    %p122 = por %p120, %p121
    %s124 = sadd.s32 %s123, 1
    %p127 = scmp.eq.s32.totalorder %s16, 1
    %p128 = scmp.ne.s32.totalorder %s123, %s125
    %p129 = scmp.eq.s32.totalorder %s16, 0
    %p130 = por %p128, %p129
    %p131 = scmp.ne.s32.totalorder %s123, %s125
    %p132 = scmp.eq.s32.totalorder %s21, 1
    %p133 = por %p131, %p132
    %p134 = scmp.ne.s32.totalorder %s125, %s126
    %p135 = scmp.eq.s32.totalorder %s21, 0
    %p136 = por %p134, %p135
    %p137 = scmp.ne.s32.totalorder %s125, %s126
    %p138 = scmp.eq.s32.totalorder %s22, 1
    %p139 = por %p137, %p138
    %p141 = scmp.ne.s32.totalorder %s126, %s140
    %p142 = scmp.eq.s32.totalorder %s22, 0
    %p143 = por %p141, %p142
    %s145 = sadd.s32 %s144, 1
    %p148 = scmp.eq.s32.totalorder %s16, 1
    %p149 = scmp.ne.s32.totalorder %s144, %s146
    %p150 = scmp.eq.s32.totalorder %s16, 0
    %p151 = por %p149, %p150
    %p152 = scmp.ne.s32.totalorder %s144, %s146
    %p153 = scmp.eq.s32.totalorder %s21, 1
    %p154 = por %p152, %p153
    %p155 = scmp.ne.s32.totalorder %s146, %s147
    %p156 = scmp.eq.s32.totalorder %s21, 0
    %p157 = por %p155, %p156
    %p158 = scmp.ne.s32.totalorder %s146, %s147
    %p159 = scmp.eq.s32.totalorder %s22, 1
    %p160 = por %p158, %p159
    %p162 = scmp.ne.s32.totalorder %s147, %s161
    %p163 = scmp.eq.s32.totalorder %s22, 0
    %p164 = por %p162, %p163
    %s166 = sadd.s32 %s165, 1
    %p169 = scmp.eq.s32.totalorder %s16, 1
    %p170 = scmp.ne.s32.totalorder %s165, %s167
    %p171 = scmp.eq.s32.totalorder %s16, 0
    %p172 = por %p170, %p171
    %p173 = scmp.ne.s32.totalorder %s165, %s167
    %p174 = scmp.eq.s32.totalorder %s21, 1
    %p175 = por %p173, %p174
    %p176 = scmp.ne.s32.totalorder %s167, %s168
    %p177 = scmp.eq.s32.totalorder %s21, 0
    %p178 = por %p176, %p177
    %p179 = scmp.ne.s32.totalorder %s167, %s168
    %p180 = scmp.eq.s32.totalorder %s22, 1
    %p181 = por %p179, %p180
    %p183 = scmp.ne.s32.totalorder %s168, %s182
    %p184 = scmp.eq.s32.totalorder %s22, 0
    %p185 = por %p183, %p184
    %s187 = sadd.s32 %s186, 1
    %p190 = scmp.eq.s32.totalorder %s16, 1
    %p191 = scmp.ne.s32.totalorder %s186, %s188
    %p192 = scmp.eq.s32.totalorder %s16, 0
    %p193 = por %p191, %p192
    %p194 = scmp.ne.s32.totalorder %s186, %s188
    %p195 = scmp.eq.s32.totalorder %s21, 1
    %p196 = por %p194, %p195
    %p197 = scmp.ne.s32.totalorder %s188, %s189
    %p198 = scmp.eq.s32.totalorder %s21, 0
    %p199 = por %p197, %p198
    %p200 = scmp.ne.s32.totalorder %s188, %s189
    %p201 = scmp.eq.s32.totalorder %s22, 1
    %p202 = por %p200, %p201
    %p204 = scmp.ne.s32.totalorder %s189, %s203
    %p205 = scmp.eq.s32.totalorder %s22, 0
    %p206 = por %p204, %p205
    %s208 = sadd.s32 %s207, 1
    %p211 = scmp.eq.s32.totalorder %s16, 1
    %p212 = scmp.ne.s32.totalorder %s207, %s209
    %p213 = scmp.eq.s32.totalorder %s16, 0
    %p214 = por %p212, %p213
    %p215 = scmp.ne.s32.totalorder %s207, %s209
    %p216 = scmp.eq.s32.totalorder %s21, 1
    %p217 = por %p215, %p216
    %p218 = scmp.ne.s32.totalorder %s209, %s210
    %p219 = scmp.eq.s32.totalorder %s21, 0
    %p220 = por %p218, %p219
    %p221 = scmp.ne.s32.totalorder %s209, %s210
    %p222 = scmp.eq.s32.totalorder %s22, 1
    %p223 = por %p221, %p222
    %p225 = scmp.ne.s32.totalorder %s210, %s224
    %p226 = scmp.eq.s32.totalorder %s22, 0
    %p227 = por %p225, %p226
    %s229 = sadd.s32 %s228, 1
    %p232 = scmp.eq.s32.totalorder %s16, 1
    %p233 = scmp.ne.s32.totalorder %s228, %s230
    %p234 = scmp.eq.s32.totalorder %s16, 0
    %p235 = por %p233, %p234
    %p236 = scmp.ne.s32.totalorder %s228, %s230
    %p237 = scmp.eq.s32.totalorder %s21, 1
    %p238 = por %p236, %p237
    %p239 = scmp.ne.s32.totalorder %s230, %s231
    %p240 = scmp.eq.s32.totalorder %s21, 0
    %p241 = por %p239, %p240
    %p242 = scmp.ne.s32.totalorder %s230, %s231
    %p243 = scmp.eq.s32.totalorder %s22, 1
    %p244 = por %p242, %p243
    %p246 = scmp.ne.s32.totalorder %s231, %s245
    %p247 = scmp.eq.s32.totalorder %s22, 0
    %p248 = por %p246, %p247
    %s249 = ssub.s32 %s16, %s23
    %p250 = scmp.eq.s32.totalorder %s249, 0
    %s252 = sadd.s32 %s251, 1
    %s253 = scalar_select %p250, %s251, %s252
    %p256 = pneg %p250
    %p257 = scmp.eq.s32.totalorder %s16, 1
    %p258 = por %p256, %p257
    %p259 = scmp.ne.s32.totalorder %s251, %s254
    %p260 = scmp.eq.s32.totalorder %s16, 0
    %p261 = por %p259, %p260
    %p262 = scmp.ne.s32.totalorder %s251, %s254
    %p263 = scmp.eq.s32.totalorder %s21, 1
    %p264 = por %p262, %p263
    %p265 = scmp.ne.s32.totalorder %s254, %s255
    %p266 = scmp.eq.s32.totalorder %s21, 0
    %p267 = por %p265, %p266
    %p268 = scmp.ne.s32.totalorder %s254, %s255
    %p269 = scmp.eq.s32.totalorder %s22, 1
    %p270 = por %p268, %p269
    %p272 = scmp.ne.s32.totalorder %s255, %s271
    %p273 = scmp.eq.s32.totalorder %s22, 0
    %p274 = por %p272, %p273
    %p275 = scmp.le.s32.totalorder 1, %s16
    %p276 = scmp.lt.s32.totalorder %s16, 3
    %p277 = pnand %p275, %p276
    %p278 = pneg %p277
    // Predicated region
    $region9: #{maskgit_train_wrapper_forward.1} parent=5 // pred_check
      _
    $region10: #{maskgit_train_wrapper_forward.1} parent=5 // pred_check_branch
      %280 = sbr.rel (%p277) target = $region12
    $region11: #{maskgit_train_wrapper_forward.1} parent=5 // pred_region
      %s281 = ssub.s32 %s16, 1
      // Predicated region
      $region13: #{maskgit_train_wrapper_forward.1} parent=11 // pred_check
        %p282 = pneg %p115
      $region14: #{maskgit_train_wrapper_forward.1} parent=11 // pred_check_branch
        %284 = sbr.rel (%p282) target = $region16
      $region15: #{maskgit_train_wrapper_forward.1} parent=11 // pred_region
        _
      $region16: #{maskgit_train_wrapper_forward.1} parent=11 // pred_fallthru
        _
      // Predicated region
      $region17: #{maskgit_train_wrapper_forward.1} parent=11 // pred_check
        %p285 = pneg %p136
      $region18: #{maskgit_train_wrapper_forward.1} parent=11 // pred_check_branch
        %287 = sbr.rel (%p285) target = $region20
      $region19: #{maskgit_train_wrapper_forward.1} parent=11 // pred_region
        _
      $region20: #{maskgit_train_wrapper_forward.1} parent=11 // pred_fallthru
        _
      // Predicated region
      $region21: #{maskgit_train_wrapper_forward.1} parent=11 // pred_check
        %p288 = pneg %p157
      $region22: #{maskgit_train_wrapper_forward.1} parent=11 // pred_check_branch
        %290 = sbr.rel (%p288) target = $region24
      $region23: #{maskgit_train_wrapper_forward.1} parent=11 // pred_region
        _
      $region24: #{maskgit_train_wrapper_forward.1} parent=11 // pred_fallthru
        _
      // Predicated region
      $region25: #{maskgit_train_wrapper_forward.1} parent=11 // pred_check
        %p291 = pneg %p178
      $region26: #{maskgit_train_wrapper_forward.1} parent=11 // pred_check_branch
        %293 = sbr.rel (%p291) target = $region28
      $region27: #{maskgit_train_wrapper_forward.1} parent=11 // pred_region
        _
      $region28: #{maskgit_train_wrapper_forward.1} parent=11 // pred_fallthru
        _
      // Predicated region
      $region29: #{maskgit_train_wrapper_forward.1} parent=11 // pred_check
        %p294 = pneg %p199
      $region30: #{maskgit_train_wrapper_forward.1} parent=11 // pred_check_branch
        %296 = sbr.rel (%p294) target = $region32
      $region31: #{maskgit_train_wrapper_forward.1} parent=11 // pred_region
        _
      $region32: #{maskgit_train_wrapper_forward.1} parent=11 // pred_fallthru
        _
      // Predicated region
      $region33: #{maskgit_train_wrapper_forward.1} parent=11 // pred_check
        %p297 = pneg %p220
      $region34: #{maskgit_train_wrapper_forward.1} parent=11 // pred_check_branch
        %299 = sbr.rel (%p297) target = $region36
      $region35: #{maskgit_train_wrapper_forward.1} parent=11 // pred_region
        _
      $region36: #{maskgit_train_wrapper_forward.1} parent=11 // pred_fallthru
        _
      // Predicated region
      $region37: #{maskgit_train_wrapper_forward.1} parent=11 // pred_check
        %p300 = pneg %p241
      $region38: #{maskgit_train_wrapper_forward.1} parent=11 // pred_check_branch
        %302 = sbr.rel (%p300) target = $region40
      $region39: #{maskgit_train_wrapper_forward.1} parent=11 // pred_region
        _
      $region40: #{maskgit_train_wrapper_forward.1} parent=11 // pred_fallthru
        _
    $region12: #{maskgit_train_wrapper_forward.1} parent=5 // pred_fallthru
      _
    %p303 = scmp.lt.s32.totalorder %s16, 2
    // Predicated region
    $region41: #{maskgit_train_wrapper_forward.1} parent=5 // pred_check
      %p304 = pneg %p303
    $region42: #{maskgit_train_wrapper_forward.1} parent=5 // pred_check_branch
      %306 = sbr.rel (%p304) target = $region44
    $region43: #{maskgit_train_wrapper_forward.1} parent=5 // pred_region
      // Predicated region
      $region45: #{maskgit_train_wrapper_forward.1} parent=43 // pred_check
        %p307 = pneg %p36
      $region46: #{maskgit_train_wrapper_forward.1} parent=43 // pred_check_branch
        %309 = sbr.rel (%p307) target = $region48
      $region47: #{maskgit_train_wrapper_forward.1} parent=43 // pred_region
        %p310 = scmp.lt.s32.totalorder %s16, 1
        %s311 = scalar_select %p310, %s16, 1
        %s312 = smul.addr %s311, 8
        %s313 = scalar_lea.vmem %s0, %s312
      $region48: #{maskgit_train_wrapper_forward.1} parent=43 // pred_fallthru
        _
      // Predicated region
      $region49: #{maskgit_train_wrapper_forward.1} parent=43 // pred_check
        %p314 = pneg %p62
      $region50: #{maskgit_train_wrapper_forward.1} parent=43 // pred_check_branch
        %316 = sbr.rel (%p314) target = $region52
      $region51: #{maskgit_train_wrapper_forward.1} parent=43 // pred_region
        %p317 = scmp.lt.s32.totalorder %s16, 1
        %s318 = scalar_select %p317, %s16, 1
        %s319 = smul.addr %s318, 8
        %s320 = scalar_lea.vmem %s1, %s319
      $region52: #{maskgit_train_wrapper_forward.1} parent=43 // pred_fallthru
        _
      // Predicated region
      $region53: #{maskgit_train_wrapper_forward.1} parent=43 // pred_check
        %p321 = pneg %p88
      $region54: #{maskgit_train_wrapper_forward.1} parent=43 // pred_check_branch
        %323 = sbr.rel (%p321) target = $region56
      $region55: #{maskgit_train_wrapper_forward.1} parent=43 // pred_region
        %p324 = scmp.lt.s32.totalorder %s16, 1
        %s325 = scalar_select %p324, %s16, 1
        %s326 = smul.addr %s325, 8
        %s327 = scalar_lea.vmem %s2, %s326
      $region56: #{maskgit_train_wrapper_forward.1} parent=43 // pred_fallthru
        _
    $region44: #{maskgit_train_wrapper_forward.1} parent=5 // pred_fallthru
      _
    %p328 = scmp.le.s32.totalorder 1, %s16
    %p329 = scmp.lt.s32.totalorder %s16, 3
    %p330 = pnand %p328, %p329
    %p331 = pneg %p330
    // Predicated region
    $region57: #{maskgit_train_wrapper_forward.1} parent=5 // pred_check
      _
    $region58: #{maskgit_train_wrapper_forward.1} parent=5 // pred_check_branch
      %333 = sbr.rel (%p330) target = $region60
    $region59: #{maskgit_train_wrapper_forward.1} parent=5 // pred_region
      %s334 = ssub.s32 %s16, 1
      %p335 = scmp.lt.s32.totalorder %s21, 1
      %s336 = scalar_select %p335, %s21, 1
      %s337 = smul.addr %s336, 8
      %s338 = scalar_lea.vmem %s0, %s337
      %p339 = pneg %p42
      %p340 = pneg %p39
      %p341 = scmp.lt.s32.totalorder %s21, 1
      %s342 = scalar_select %p341, %s21, 1
      %s343 = smul.addr %s342, 8
      %s344 = scalar_lea.vmem %s1, %s343
      %p345 = pneg %p68
      %p346 = pneg %p65
      %p347 = scmp.lt.s32.totalorder %s21, 1
      %s348 = scalar_select %p347, %s21, 1
      %s349 = smul.addr %s348, 8
      %s350 = scalar_lea.vmem %s2, %s349
      %p351 = pneg %p94
      %p352 = pneg %p91
      %p353 = pneg %p115
      %p354 = pneg %p112
      %p355 = pneg %p136
      %p356 = pneg %p133
      %p357 = pneg %p157
      %p358 = pneg %p154
      %p359 = pneg %p178
      %p360 = pneg %p175
      %p361 = pneg %p199
      %p362 = pneg %p196
      %p363 = pneg %p220
      %p364 = pneg %p217
      %p365 = pneg %p241
      %p366 = pneg %p238
      %p367 = pneg %p267
      %p368 = pneg %p264
      %p369 = scmp.lt.s32.totalorder %s21, 1
      %s370 = scalar_select %p369, %s21, 1
      %s371 = smul.addr %s370, 8
      %s372 = scalar_lea.vmem %s10, %s371
      %p373 = scmp.lt.s32.totalorder %s21, 1
      %s374 = scalar_select %p373, %s21, 1
      %s375 = smul.addr %s374, 8
      %s376 = scalar_lea.vmem %s0, %s375
      %p377 = scmp.lt.s32.totalorder %s21, 1
      %s378 = scalar_select %p377, %s21, 1
      %s379 = smul.addr %s378, 8
      %s380 = scalar_lea.vmem %s1, %s379
      %p381 = scmp.lt.s32.totalorder %s21, 1
      %s382 = scalar_select %p381, %s21, 1
      %s383 = smul.addr %s382, 8
      %s384 = scalar_lea.vmem %s2, %s383
      %p385 = scmp.lt.s32.totalorder %s21, 1
      %s386 = scalar_select %p385, %s21, 1
      %s387 = smul.addr %s386, 8
      %s388 = scalar_lea.vmem %s10, %s387
      %v390 = vld [vmem:[%s376] sm:$0xff]
      %v391 = vlaneseq
      %v392 = vand.u32 %v391, 127
      %393 = vset.pattern.permute.xlu0 0
      %394 = vperm.xlu0 %393, %v390
      %v395 = vpop.permute.xlu0 %394
      %vm396 = vcmp.eq.s32.totalorder %v392, %v395
      %v397 = vsel %vm396, 1, 0
      %v398 = vcvt.s32.f32 %v397
      %v399 = vpack.c.bf16 %v398, %v398
      %v400 = vld [vmem:[%s3] sm:$0xf]
      %v401 = vld [vmem:[%s3 + $0x4] sm:$0xf]
      %v402 = vld [vmem:[%s3 + $0x8] sm:$0xf]
      %v403 = vld [vmem:[%s3 + $0xc] sm:$0xf]
      %v404 = vld [vmem:[%s3 + $0x10] sm:$0xf]
      %v405 = vld [vmem:[%s3 + $0x14] sm:$0xf]
      %v406 = vld [vmem:[%s3 + $0x18] sm:$0xf]
      %v407 = vld [vmem:[%s3 + $0x1c] sm:$0xf]
      %v408 = vld [vmem:[%s3 + $0x20] sm:$0xf]
      %v409 = vld [vmem:[%s3 + $0x24] sm:$0xf]
      %v410 = vld [vmem:[%s3 + $0x28] sm:$0xf]
      %v411 = vld [vmem:[%s3 + $0x2c] sm:$0xf]
      %v412 = vld [vmem:[%s3 + $0x30] sm:$0xf]
      %v413 = vld [vmem:[%s3 + $0x34] sm:$0xf]
      %v414 = vld [vmem:[%s3 + $0x38] sm:$0xf]
      %v415 = vld [vmem:[%s3 + $0x3c] sm:$0xf]
      %v432 = vunpack.c.l.b16 %v400
      %v433 = vunpack.c.l.b16 %v401
      %v434 = vunpack.c.l.b16 %v402
      %v435 = vunpack.c.l.b16 %v403
      %v436 = vunpack.c.l.b16 %v404
      %v437 = vunpack.c.l.b16 %v405
      %v438 = vunpack.c.l.b16 %v406
      %v439 = vunpack.c.l.b16 %v407
      %v440 = vunpack.c.l.b16 %v408
      %v441 = vunpack.c.l.b16 %v409
      %v442 = vunpack.c.l.b16 %v410
      %v443 = vunpack.c.l.b16 %v411
      %v444 = vunpack.c.l.b16 %v412
      %v445 = vunpack.c.l.b16 %v413
      %v446 = vunpack.c.l.b16 %v414
      %v447 = vunpack.c.l.b16 %v415
      %v448 = vpack.c.b16 %v433, %v432
      %v449 = vpack.c.b16 %v435, %v434
      %v450 = vpack.c.b16 %v437, %v436
      %v451 = vpack.c.b16 %v439, %v438
      %v452 = vpack.c.b16 %v441, %v440
      %v453 = vpack.c.b16 %v443, %v442
      %v454 = vpack.c.b16 %v445, %v444
      %v455 = vpack.c.b16 %v447, %v446
      %464 = vmatprep.subr.bf16.mxu0 0
      %465 = vmatpush1.bf16.msra.mxu0 %v455
      %466 = vmatprep.subr.bf16.mxu0 0
      %467 = vmatpush1.bf16.msra.mxu0 %v454
      %468 = vmatprep.subr.bf16.mxu0 0
      %469 = vmatpush1.bf16.msra.mxu0 %v453
      %470 = vmatprep.subr.bf16.mxu0 0
      %471 = vmatpush1.bf16.msra.mxu0 %v452
      %472 = vmatprep.subr.bf16.mxu0 0
      %473 = vmatpush1.bf16.msra.mxu0 %v451
      %474 = vmatprep.subr.bf16.mxu0 0
      %475 = vmatpush1.bf16.msra.mxu0 %v450
      %476 = vmatprep.subr.bf16.mxu0 0
      %477 = vmatpush1.bf16.msra.mxu0 %v449
      %478 = vmatprep.subr.bf16.mxu0 0
      %479 = vmatpush1.bf16.msra.mxu0 %v448
      %480 = vmatprep.subr.bf16.mxu0 0
      %481 = vmatpush2.bf16.msra.mxu0 0
      %482 = vmatprep.subr.bf16.mxu0 0
      %483 = vmatpush2.bf16.msra.mxu0 0
      %484 = vmatprep.subr.bf16.mxu0 0
      %485 = vmatpush2.bf16.msra.mxu0 0
      %486 = vmatprep.subr.bf16.mxu0 0
      %487 = vmatpush2.bf16.msra.mxu0 0
      %488 = vmatprep.subr.bf16.mxu0 0
      %489 = vmatpush2.bf16.msra.mxu0 0
      %490 = vmatprep.subr.bf16.mxu0 0
      %491 = vmatpush2.bf16.msra.mxu0 0
      %492 = vmatprep.subr.bf16.mxu0 0
      %493 = vmatpush2.bf16.msra.mxu0 0
      %494 = vmatprep.subr.bf16.mxu0 0
      %495 = vmatpush2.bf16.msra.mxu0 0
      %496 = vmatprep.mubr.bf16.mxu0 0
      %497 = vmatmul.mubr.bf16.gmra.mxu0 %v399
      %v498 = vpop.f32.mrf.mxu0
      %v499 = vadd.f32 0.0, %v498
      %v500 = vpop.f32.mrf.mxu0
      %v501 = vpop.f32.mrf.mxu0
      %v502 = vpop.f32.mrf.mxu0
      %503 = vdwg.mxu0
      %v504 = vld [vmem:[%s4] sm:$0xff]
      %v505 = vadd.f32 %v499, %v504
      %506 = vadd.xlane.f32.xlu0 %v505
      %v507 = vpop.xlane.xlu0 %506
      %v508 = vmul.f32 %v507, 0.03125
      %v509 = vmul.f32 %v505, %v505
      %510 = vadd.xlane.f32.xlu0 %v509
      %v511 = vpop.xlane.xlu0 %510
      %v512 = vmul.f32 %v511, 0.03125
      %v513 = vmul.f32 %v508, %v508
      %v514 = vsub.f32 %v512, %v513
      %v515 = vmax.f32 %v514, 0.0
      %v516 = vsub.f32 %v505, %v508
      %v517 = vadd.f32 %v515, 1e-05
      %v518 = vrsqrt.pop %v517
      %v519 = vmul.f32 %v516, %v518
      %v520 = vpack.c.bf16 %v519, %v519
      %v521 = vld [vmem:[%s5] sm:$0xff]
      %v522 = vld [vmem:[%s5 + $0x8] sm:$0xf]
      %v523 = vld [vmem:[%s5 + $0xc] sm:$0xff]
      %v524 = vld [vmem:[%s5 + $0x14] sm:$0xf]
      %v525 = vld [vmem:[%s5 + $0x18] sm:$0xff]
      %v526 = vld [vmem:[%s5 + $0x20] sm:$0xf]
      %v527 = vld [vmem:[%s5 + $0x24] sm:$0xff]
      %v528 = vld [vmem:[%s5 + $0x2c] sm:$0xf]
      %v529 = vld [vmem:[%s5 + $0x30] sm:$0xff]
      %v530 = vld [vmem:[%s5 + $0x38] sm:$0xf]
      %v531 = vld [vmem:[%s5 + $0x3c] sm:$0xff]
      %v532 = vld [vmem:[%s5 + $0x44] sm:$0xf]
      %v533 = vld [vmem:[%s5 + $0x48] sm:$0xff]
      %v534 = vld [vmem:[%s5 + $0x50] sm:$0xf]
      %v535 = vld [vmem:[%s5 + $0x54] sm:$0xff]
      %v536 = vld [vmem:[%s5 + $0x5c] sm:$0xf]
      %v537 = vld [vmem:[%s5 + $0x60] sm:$0xff]
      %v538 = vld [vmem:[%s5 + $0x68] sm:$0xf]
      %v539 = vld [vmem:[%s5 + $0x6c] sm:$0xff]
      %v540 = vld [vmem:[%s5 + $0x74] sm:$0xf]
      %v541 = vld [vmem:[%s5 + $0x78] sm:$0xff]
      %v542 = vld [vmem:[%s5 + $0x80] sm:$0xf]
      %v543 = vld [vmem:[%s5 + $0x84] sm:$0xff]
      %v544 = vld [vmem:[%s5 + $0x8c] sm:$0xf]
      %v545 = vld [vmem:[%s5 + $0x90] sm:$0xff]
      %v546 = vld [vmem:[%s5 + $0x98] sm:$0xf]
      %v547 = vld [vmem:[%s5 + $0x9c] sm:$0xff]
      %v548 = vld [vmem:[%s5 + $0xa4] sm:$0xf]
      %v549 = vld [vmem:[%s5 + $0xa8] sm:$0xff]
      %v550 = vld [vmem:[%s5 + $0xb0] sm:$0xf]
      %v551 = vld [vmem:[%s5 + $0xb4] sm:$0xff]
      %v552 = vld [vmem:[%s5 + $0xbc] sm:$0xf]
      %v585 = vunpack.c.l.b16 %v521
      %v586 = vunpack.c.h.b16 %v521
      %v587 = vunpack.c.l.b16 %v522
      %v588 = vunpack.c.l.b16 %v523
      %v589 = vunpack.c.h.b16 %v523
      %v590 = vunpack.c.l.b16 %v524
      %v591 = vunpack.c.l.b16 %v525
      %v592 = vunpack.c.h.b16 %v525
      %v593 = vunpack.c.l.b16 %v526
      %v594 = vunpack.c.l.b16 %v527
      %v595 = vunpack.c.h.b16 %v527
      %v596 = vunpack.c.l.b16 %v528
      %v597 = vunpack.c.l.b16 %v529
      %v598 = vunpack.c.h.b16 %v529
      %v599 = vunpack.c.l.b16 %v530
      %v600 = vunpack.c.l.b16 %v531
      %v601 = vunpack.c.h.b16 %v531
      %v602 = vunpack.c.l.b16 %v532
      %v603 = vunpack.c.l.b16 %v533
      %v604 = vunpack.c.h.b16 %v533
      %v605 = vunpack.c.l.b16 %v534
      %v606 = vunpack.c.l.b16 %v535
      %v607 = vunpack.c.h.b16 %v535
      %v608 = vunpack.c.l.b16 %v536
      %v609 = vunpack.c.l.b16 %v537
      %v610 = vunpack.c.h.b16 %v537
      %v611 = vunpack.c.l.b16 %v538
      %v612 = vunpack.c.l.b16 %v539
      %v613 = vunpack.c.h.b16 %v539
      %v614 = vunpack.c.l.b16 %v540
      %v615 = vunpack.c.l.b16 %v541
      %v616 = vunpack.c.h.b16 %v541
      %v617 = vunpack.c.l.b16 %v542
      %v618 = vunpack.c.l.b16 %v543
      %v619 = vunpack.c.h.b16 %v543
      %v620 = vunpack.c.l.b16 %v544
      %v621 = vunpack.c.l.b16 %v545
      %v622 = vunpack.c.h.b16 %v545
      %v623 = vunpack.c.l.b16 %v546
      %v624 = vunpack.c.l.b16 %v547
      %v625 = vunpack.c.h.b16 %v547
      %v626 = vunpack.c.l.b16 %v548
      %v627 = vunpack.c.l.b16 %v549
      %v628 = vunpack.c.h.b16 %v549
      %v629 = vunpack.c.l.b16 %v550
      %v630 = vunpack.c.l.b16 %v551
      %v631 = vunpack.c.h.b16 %v551
      %v632 = vunpack.c.l.b16 %v552
      %v633 = vpack.c.b16 %v588, %v585
      %v634 = vpack.c.b16 %v589, %v586
      %v635 = vpack.c.b16 %v590, %v587
      %v636 = vpack.c.b16 %v594, %v591
      %v637 = vpack.c.b16 %v595, %v592
      %v638 = vpack.c.b16 %v596, %v593
      %v639 = vpack.c.b16 %v600, %v597
      %v640 = vpack.c.b16 %v601, %v598
      %v641 = vpack.c.b16 %v602, %v599
      %v642 = vpack.c.b16 %v606, %v603
      %v643 = vpack.c.b16 %v607, %v604
      %v644 = vpack.c.b16 %v608, %v605
      %v645 = vpack.c.b16 %v612, %v609
      %v646 = vpack.c.b16 %v613, %v610
      %v647 = vpack.c.b16 %v614, %v611
      %v648 = vpack.c.b16 %v618, %v615
      %v649 = vpack.c.b16 %v619, %v616
      %v650 = vpack.c.b16 %v620, %v617
      %v651 = vpack.c.b16 %v624, %v621
      %v652 = vpack.c.b16 %v625, %v622
      %v653 = vpack.c.b16 %v626, %v623
      %v654 = vpack.c.b16 %v630, %v627
      %v655 = vpack.c.b16 %v631, %v628
      %v656 = vpack.c.b16 %v632, %v629
      %681 = vmatprep.subr.bf16.mxu0 %v655
      %682 = vmatpush1.bf16.msra.mxu0 %v654
      %683 = vmatprep.subr.bf16.mxu0 %v652
      %684 = vmatpush1.bf16.msra.mxu0 %v651
      %685 = vmatprep.subr.bf16.mxu0 %v649
      %686 = vmatpush1.bf16.msra.mxu0 %v648
      %687 = vmatprep.subr.bf16.mxu0 %v646
      %688 = vmatpush1.bf16.msra.mxu0 %v645
      %689 = vmatprep.subr.bf16.mxu0 %v643
      %690 = vmatpush1.bf16.msra.mxu0 %v642
      %691 = vmatprep.subr.bf16.mxu0 %v640
      %692 = vmatpush1.bf16.msra.mxu0 %v639
      %693 = vmatprep.subr.bf16.mxu0 %v637
      %694 = vmatpush1.bf16.msra.mxu0 %v636
      %695 = vmatprep.subr.bf16.mxu0 %v634
      %696 = vmatpush1.bf16.msra.mxu0 %v633
      %697 = vmatprep.subr.bf16.mxu0 0
      %698 = vmatpush2.bf16.msra.mxu0 0
      %699 = vmatprep.subr.bf16.mxu0 0
      %700 = vmatpush2.bf16.msra.mxu0 0
      %701 = vmatprep.subr.bf16.mxu0 0
      %702 = vmatpush2.bf16.msra.mxu0 0
      %703 = vmatprep.subr.bf16.mxu0 0
      %704 = vmatpush2.bf16.msra.mxu0 0
      %705 = vmatprep.subr.bf16.mxu0 0
      %706 = vmatpush2.bf16.msra.mxu0 0
      %707 = vmatprep.subr.bf16.mxu0 0
      %708 = vmatpush2.bf16.msra.mxu0 0
      %709 = vmatprep.subr.bf16.mxu0 0
      %710 = vmatpush2.bf16.msra.mxu0 0
      %711 = vmatprep.subr.bf16.mxu0 0
      %712 = vmatpush2.bf16.msra.mxu0 0
      %713 = vmatprep.mubr.bf16.mxu0 0
      %714 = vmatmul.mubr.bf16.gmra.mxu0 %v520
      %v715 = vpop.f32.mrf.mxu0
      %v716 = vadd.f32 0.0, %v715
      %v717 = vpop.f32.mrf.mxu0
      %v718 = vadd.f32 0.0, %v717
      %v719 = vpop.f32.mrf.mxu0
      %v720 = vpop.f32.mrf.mxu0
      %721 = vdwg.mxu0
      %722 = vmatprep.subr.bf16.mxu0 0
      %723 = vmatpush1.bf16.msra.mxu0 %v656
      %724 = vmatprep.subr.bf16.mxu0 0
      %725 = vmatpush1.bf16.msra.mxu0 %v653
      %726 = vmatprep.subr.bf16.mxu0 0
      %727 = vmatpush1.bf16.msra.mxu0 %v650
      %728 = vmatprep.subr.bf16.mxu0 0
      %729 = vmatpush1.bf16.msra.mxu0 %v647
      %730 = vmatprep.subr.bf16.mxu0 0
      %731 = vmatpush1.bf16.msra.mxu0 %v644
      %732 = vmatprep.subr.bf16.mxu0 0
      %733 = vmatpush1.bf16.msra.mxu0 %v641
      %734 = vmatprep.subr.bf16.mxu0 0
      %735 = vmatpush1.bf16.msra.mxu0 %v638
      %736 = vmatprep.subr.bf16.mxu0 0
      %737 = vmatpush1.bf16.msra.mxu0 %v635
      %738 = vmatprep.subr.bf16.mxu0 0
      %739 = vmatpush2.bf16.msra.mxu0 0
      %740 = vmatprep.subr.bf16.mxu0 0
      %741 = vmatpush2.bf16.msra.mxu0 0
      %742 = vmatprep.subr.bf16.mxu0 0
      %743 = vmatpush2.bf16.msra.mxu0 0
      %744 = vmatprep.subr.bf16.mxu0 0
      %745 = vmatpush2.bf16.msra.mxu0 0
      %746 = vmatprep.subr.bf16.mxu0 0
      %747 = vmatpush2.bf16.msra.mxu0 0
      %748 = vmatprep.subr.bf16.mxu0 0
      %749 = vmatpush2.bf16.msra.mxu0 0
      %750 = vmatprep.subr.bf16.mxu0 0
      %751 = vmatpush2.bf16.msra.mxu0 0
      %752 = vmatprep.subr.bf16.mxu0 0
      %753 = vmatpush2.bf16.msra.mxu0 0
      %754 = vmatprep.mubr.bf16.mxu0 0
      %755 = vmatmul.mubr.bf16.gmra.mxu0 %v520
      %v756 = vpop.f32.mrf.mxu0
      %v757 = vadd.f32 0.0, %v756
      %v758 = vpop.f32.mrf.mxu0
      %v759 = vpop.f32.mrf.mxu0
      %v760 = vpop.f32.mrf.mxu0
      %761 = vdwg.mxu0
      %v762 = vpack.c.bf16 %v716, %v716
      %v763 = vpack.c.bf16 %v718, %v718
      %v764 = vpack.c.bf16 %v757, %v757
      %765 = vmatprep.subr.bf16.mxu0 0
      %766 = vmatpush1.bf16.xpose.msra.mxu0 0
      %767 = vmatprep.subr.bf16.mxu0 0
      %768 = vmatpush1.bf16.xpose.msra.mxu0 0
      %769 = vmatprep.subr.bf16.mxu0 0
      %770 = vmatpush1.bf16.xpose.msra.mxu0 0
      %771 = vmatprep.subr.bf16.mxu0 0
      %772 = vmatpush1.bf16.xpose.msra.mxu0 0
      %773 = vmatprep.subr.bf16.mxu0 0
      %774 = vmatpush1.bf16.xpose.msra.mxu0 0
      %775 = vmatprep.subr.bf16.mxu0 0
      %776 = vmatpush1.bf16.xpose.msra.mxu0 0
      %777 = vmatprep.subr.bf16.mxu0 0
      %778 = vmatpush1.bf16.xpose.msra.mxu0 0
      %779 = vmatprep.subr.bf16.mxu0 0
      %780 = vmatpush1.bf16.xpose.msra.mxu0 %v763
      %781 = vmatprep.subr.bf16.mxu0 0
      %782 = vmatpush2.bf16.xpose.msra.mxu0 0
      %783 = vmatprep.subr.bf16.mxu0 0
      %784 = vmatpush2.bf16.xpose.msra.mxu0 0
      %785 = vmatprep.subr.bf16.mxu0 0
      %786 = vmatpush2.bf16.xpose.msra.mxu0 0
      %787 = vmatprep.subr.bf16.mxu0 0
      %788 = vmatpush2.bf16.xpose.msra.mxu0 0
      %789 = vmatprep.subr.bf16.mxu0 0
      %790 = vmatpush2.bf16.xpose.msra.mxu0 0
      %791 = vmatprep.subr.bf16.mxu0 0
      %792 = vmatpush2.bf16.xpose.msra.mxu0 0
      %793 = vmatprep.subr.bf16.mxu0 0
      %794 = vmatpush2.bf16.xpose.msra.mxu0 0
      %795 = vmatprep.subr.bf16.mxu0 0
      %796 = vmatpush2.bf16.xpose.msra.mxu0 0
      %797 = vmatprep.mubr.bf16.mxu0 0
      %798 = vmatmul.mubr.bf16.gmra.mxu0 %v762
      %v799 = vpop.f32.mrf.mxu0
      %v800 = vadd.f32 0.0, %v799
      %v801 = vpop.f32.mrf.mxu0
      %v802 = vpop.f32.mrf.mxu0
      %v803 = vpop.f32.mrf.mxu0
      %804 = vdwg.mxu0
      %vm805 = vcmask 64512
      %v806 = vsel %vm805, %v800, -inf
      %807 = vmax.xlane.f32.xlu0 %v806
      %v808 = vpop.xlane.xlu0 %807
      %v809 = vsub.f32 %v800, %v808
      %v810 = vmul.f32 %v809, 1.442695
      %v811 = vpow.pop %v810
      %v812 = vsel %vm805, %v811, 0.0
      %813 = vadd.xlane.f32.xlu0 %v812
      %v814 = vpop.xlane.xlu0 %813
      %v815 = vrcp.pop %v814
      %v816 = vmul.f32 %v811, %v815
      %v817 = vpack.c.bf16 %v816, %v816
      %v819 = vsel %vm805, %v817, 0
      %vm821 = vcmask 1043456
      %v823 = vsel %vm821, %v764, 0
      %825 = vmatprep.subr.bf16.mxu0 0
      %826 = vmatpush1.bf16.msra.mxu0 0
      %827 = vmatprep.subr.bf16.mxu0 0
      %828 = vmatpush1.bf16.msra.mxu0 0
      %829 = vmatprep.subr.bf16.mxu0 0
      %830 = vmatpush1.bf16.msra.mxu0 0
      %831 = vmatprep.subr.bf16.mxu0 0
      %832 = vmatpush1.bf16.msra.mxu0 0
      %833 = vmatprep.subr.bf16.mxu0 0
      %834 = vmatpush1.bf16.msra.mxu0 0
      %835 = vmatprep.subr.bf16.mxu0 0
      %836 = vmatpush1.bf16.msra.mxu0 0
      %837 = vmatprep.subr.bf16.mxu0 0
      %838 = vmatpush1.bf16.msra.mxu0 0
      %839 = vmatprep.subr.bf16.mxu0 0
      %840 = vmatpush1.bf16.msra.mxu0 %v823
      %841 = vmatprep.subr.bf16.mxu0 0
      %842 = vmatpush2.bf16.msra.mxu0 0
      %843 = vmatprep.subr.bf16.mxu0 0
      %844 = vmatpush2.bf16.msra.mxu0 0
      %845 = vmatprep.subr.bf16.mxu0 0
      %846 = vmatpush2.bf16.msra.mxu0 0
      %847 = vmatprep.subr.bf16.mxu0 0
      %848 = vmatpush2.bf16.msra.mxu0 0
      %849 = vmatprep.subr.bf16.mxu0 0
      %850 = vmatpush2.bf16.msra.mxu0 0
      %851 = vmatprep.subr.bf16.mxu0 0
      %852 = vmatpush2.bf16.msra.mxu0 0
      %853 = vmatprep.subr.bf16.mxu0 0
      %854 = vmatpush2.bf16.msra.mxu0 0
      %855 = vmatprep.subr.bf16.mxu0 0
      %856 = vmatpush2.bf16.msra.mxu0 0
      %857 = vmatprep.mubr.bf16.mxu0 0
      %858 = vmatmul.mubr.bf16.gmra.mxu0 %v819
      %v859 = vpop.f32.mrf.mxu0
      %v860 = vadd.f32 0.0, %v859
      %v861 = vpop.f32.mrf.mxu0
      %v862 = vpop.f32.mrf.mxu0
      %v863 = vpop.f32.mrf.mxu0
      %864 = vdwg.mxu0
      %v865 = vpack.c.bf16 %v860, %v860
      %v866 = vld [vmem:[%s6] sm:$0xf]
      %v867 = vld [vmem:[%s6 + $0x4] sm:$0xf]
      %v868 = vld [vmem:[%s6 + $0x8] sm:$0xf]
      %v869 = vld [vmem:[%s6 + $0xc] sm:$0xf]
      %v870 = vld [vmem:[%s6 + $0x10] sm:$0xf]
      %v871 = vld [vmem:[%s6 + $0x14] sm:$0xf]
      %v872 = vld [vmem:[%s6 + $0x18] sm:$0xf]
      %v873 = vld [vmem:[%s6 + $0x1c] sm:$0xf]
      %v874 = vld [vmem:[%s6 + $0x20] sm:$0xf]
      %v875 = vld [vmem:[%s6 + $0x24] sm:$0xf]
      %v876 = vld [vmem:[%s6 + $0x28] sm:$0xf]
      %v877 = vld [vmem:[%s6 + $0x2c] sm:$0xf]
      %v878 = vld [vmem:[%s6 + $0x30] sm:$0xf]
      %v879 = vld [vmem:[%s6 + $0x34] sm:$0xf]
      %v880 = vld [vmem:[%s6 + $0x38] sm:$0xf]
      %v881 = vld [vmem:[%s6 + $0x3c] sm:$0xf]
      %v898 = vunpack.c.l.b16 %v866
      %v899 = vunpack.c.l.b16 %v867
      %v900 = vunpack.c.l.b16 %v868
      %v901 = vunpack.c.l.b16 %v869
      %v902 = vunpack.c.l.b16 %v870
      %v903 = vunpack.c.l.b16 %v871
      %v904 = vunpack.c.l.b16 %v872
      %v905 = vunpack.c.l.b16 %v873
      %v906 = vunpack.c.l.b16 %v874
      %v907 = vunpack.c.l.b16 %v875
      %v908 = vunpack.c.l.b16 %v876
      %v909 = vunpack.c.l.b16 %v877
      %v910 = vunpack.c.l.b16 %v878
      %v911 = vunpack.c.l.b16 %v879
      %v912 = vunpack.c.l.b16 %v880
      %v913 = vunpack.c.l.b16 %v881
      %v914 = vpack.c.b16 %v899, %v898
      %v915 = vpack.c.b16 %v901, %v900
      %v916 = vpack.c.b16 %v903, %v902
      %v917 = vpack.c.b16 %v905, %v904
      %v918 = vpack.c.b16 %v907, %v906
      %v919 = vpack.c.b16 %v909, %v908
      %v920 = vpack.c.b16 %v911, %v910
      %v921 = vpack.c.b16 %v913, %v912
      %930 = vmatprep.subr.bf16.mxu0 0
      %931 = vmatpush1.bf16.msra.mxu0 %v921
      %932 = vmatprep.subr.bf16.mxu0 0
      %933 = vmatpush1.bf16.msra.mxu0 %v920
      %934 = vmatprep.subr.bf16.mxu0 0
      %935 = vmatpush1.bf16.msra.mxu0 %v919
      %936 = vmatprep.subr.bf16.mxu0 0
      %937 = vmatpush1.bf16.msra.mxu0 %v918
      %938 = vmatprep.subr.bf16.mxu0 0
      %939 = vmatpush1.bf16.msra.mxu0 %v917
      %940 = vmatprep.subr.bf16.mxu0 0
      %941 = vmatpush1.bf16.msra.mxu0 %v916
      %942 = vmatprep.subr.bf16.mxu0 0
      %943 = vmatpush1.bf16.msra.mxu0 %v915
      %944 = vmatprep.subr.bf16.mxu0 0
      %945 = vmatpush1.bf16.msra.mxu0 %v914
      %946 = vmatprep.subr.bf16.mxu0 0
      %947 = vmatpush2.bf16.msra.mxu0 0
      %948 = vmatprep.subr.bf16.mxu0 0
      %949 = vmatpush2.bf16.msra.mxu0 0
      %950 = vmatprep.subr.bf16.mxu0 0
      %951 = vmatpush2.bf16.msra.mxu0 0
      %952 = vmatprep.subr.bf16.mxu0 0
      %953 = vmatpush2.bf16.msra.mxu0 0
      %954 = vmatprep.subr.bf16.mxu0 0
      %955 = vmatpush2.bf16.msra.mxu0 0
      %956 = vmatprep.subr.bf16.mxu0 0
      %957 = vmatpush2.bf16.msra.mxu0 0
      %958 = vmatprep.subr.bf16.mxu0 0
      %959 = vmatpush2.bf16.msra.mxu0 0
      %960 = vmatprep.subr.bf16.mxu0 0
      %961 = vmatpush2.bf16.msra.mxu0 0
      %962 = vmatprep.mubr.bf16.mxu0 0
      %963 = vmatmul.mubr.bf16.gmra.mxu0 %v865
      %v964 = vpop.f32.mrf.mxu0
      %v965 = vadd.f32 0.0, %v964
      %v966 = vpop.f32.mrf.mxu0
      %v967 = vpop.f32.mrf.mxu0
      %v968 = vpop.f32.mrf.mxu0
      %969 = vdwg.mxu0
      %v970 = vadd.f32 %v505, %v965
      %971 = vadd.xlane.f32.xlu0 %v970
      %v972 = vpop.xlane.xlu0 %971
      %v973 = vmul.f32 %v972, 0.03125
      %v974 = vmul.f32 %v970, %v970
      %975 = vadd.xlane.f32.xlu0 %v974
      %v976 = vpop.xlane.xlu0 %975
      %v977 = vmul.f32 %v976, 0.03125
      %v978 = vmul.f32 %v973, %v973
      %v979 = vsub.f32 %v977, %v978
      %v980 = vmax.f32 %v979, 0.0
      %v981 = vsub.f32 %v970, %v973
      %v982 = vadd.f32 %v980, 1e-05
      %v983 = vrsqrt.pop %v982
      %v984 = vmul.f32 %v981, %v983
      %v985 = vpack.c.bf16 %v984, %v984
      %v986 = vld [vmem:[%s7] sm:$0xf]
      %v987 = vld [vmem:[%s7 + $0x4] sm:$0xf]
      %v988 = vld [vmem:[%s7 + $0x8] sm:$0xf]
      %v989 = vld [vmem:[%s7 + $0xc] sm:$0xf]
      %v990 = vld [vmem:[%s7 + $0x10] sm:$0xf]
      %v991 = vld [vmem:[%s7 + $0x14] sm:$0xf]
      %v992 = vld [vmem:[%s7 + $0x18] sm:$0xf]
      %v993 = vld [vmem:[%s7 + $0x1c] sm:$0xf]
      %v994 = vld [vmem:[%s7 + $0x20] sm:$0xf]
      %v995 = vld [vmem:[%s7 + $0x24] sm:$0xf]
      %v996 = vld [vmem:[%s7 + $0x28] sm:$0xf]
      %v997 = vld [vmem:[%s7 + $0x2c] sm:$0xf]
      %v998 = vld [vmem:[%s7 + $0x30] sm:$0xf]
      %v999 = vld [vmem:[%s7 + $0x34] sm:$0xf]
      %v1000 = vld [vmem:[%s7 + $0x38] sm:$0xf]
      %v1001 = vld [vmem:[%s7 + $0x3c] sm:$0xf]
      %v1018 = vunpack.c.l.b16 %v986
      %v1019 = vunpack.c.l.b16 %v987
      %v1020 = vunpack.c.l.b16 %v988
      %v1021 = vunpack.c.l.b16 %v989
      %v1022 = vunpack.c.l.b16 %v990
      %v1023 = vunpack.c.l.b16 %v991
      %v1024 = vunpack.c.l.b16 %v992
      %v1025 = vunpack.c.l.b16 %v993
      %v1026 = vunpack.c.l.b16 %v994
      %v1027 = vunpack.c.l.b16 %v995
      %v1028 = vunpack.c.l.b16 %v996
      %v1029 = vunpack.c.l.b16 %v997
      %v1030 = vunpack.c.l.b16 %v998
      %v1031 = vunpack.c.l.b16 %v999
      %v1032 = vunpack.c.l.b16 %v1000
      %v1033 = vunpack.c.l.b16 %v1001
      %v1034 = vpack.c.b16 %v1019, %v1018
      %v1035 = vpack.c.b16 %v1021, %v1020
      %v1036 = vpack.c.b16 %v1023, %v1022
      %v1037 = vpack.c.b16 %v1025, %v1024
      %v1038 = vpack.c.b16 %v1027, %v1026
      %v1039 = vpack.c.b16 %v1029, %v1028
      %v1040 = vpack.c.b16 %v1031, %v1030
      %v1041 = vpack.c.b16 %v1033, %v1032
      %1050 = vmatprep.subr.bf16.mxu0 0
      %1051 = vmatpush1.bf16.msra.mxu0 %v1041
      %1052 = vmatprep.subr.bf16.mxu0 0
      %1053 = vmatpush1.bf16.msra.mxu0 %v1040
      %1054 = vmatprep.subr.bf16.mxu0 0
      %1055 = vmatpush1.bf16.msra.mxu0 %v1039
      %1056 = vmatprep.subr.bf16.mxu0 0
      %1057 = vmatpush1.bf16.msra.mxu0 %v1038
      %1058 = vmatprep.subr.bf16.mxu0 0
      %1059 = vmatpush1.bf16.msra.mxu0 %v1037
      %1060 = vmatprep.subr.bf16.mxu0 0
      %1061 = vmatpush1.bf16.msra.mxu0 %v1036
      %1062 = vmatprep.subr.bf16.mxu0 0
      %1063 = vmatpush1.bf16.msra.mxu0 %v1035
      %1064 = vmatprep.subr.bf16.mxu0 0
      %1065 = vmatpush1.bf16.msra.mxu0 %v1034
      %1066 = vmatprep.subr.bf16.mxu0 0
      %1067 = vmatpush2.bf16.msra.mxu0 0
      %1068 = vmatprep.subr.bf16.mxu0 0
      %1069 = vmatpush2.bf16.msra.mxu0 0
      %1070 = vmatprep.subr.bf16.mxu0 0
      %1071 = vmatpush2.bf16.msra.mxu0 0
      %1072 = vmatprep.subr.bf16.mxu0 0
      %1073 = vmatpush2.bf16.msra.mxu0 0
      %1074 = vmatprep.subr.bf16.mxu0 0
      %1075 = vmatpush2.bf16.msra.mxu0 0
      %1076 = vmatprep.subr.bf16.mxu0 0
      %1077 = vmatpush2.bf16.msra.mxu0 0
      %1078 = vmatprep.subr.bf16.mxu0 0
      %1079 = vmatpush2.bf16.msra.mxu0 0
      %1080 = vmatprep.subr.bf16.mxu0 0
      %1081 = vmatpush2.bf16.msra.mxu0 0
      %1082 = vmatprep.mubr.bf16.mxu0 0
      %1083 = vmatmul.mubr.bf16.gmra.mxu0 %v985
      %v1084 = vpop.f32.mrf.mxu0
      %v1085 = vadd.f32 0.0, %v1084
      %v1086 = vpop.f32.mrf.mxu0
      %v1087 = vpop.f32.mrf.mxu0
      %v1088 = vpop.f32.mrf.mxu0
      %1089 = vdwg.mxu0
      %v1090 = vmax.f32 %v1085, 0.0
      %v1091 = vpack.c.bf16 %v1090, %v1090
      %v1092 = vld [vmem:[%s8] sm:$0xf]
      %v1093 = vld [vmem:[%s8 + $0x4] sm:$0xf]
      %v1094 = vld [vmem:[%s8 + $0x8] sm:$0xf]
      %v1095 = vld [vmem:[%s8 + $0xc] sm:$0xf]
      %v1096 = vld [vmem:[%s8 + $0x10] sm:$0xf]
      %v1097 = vld [vmem:[%s8 + $0x14] sm:$0xf]
      %v1098 = vld [vmem:[%s8 + $0x18] sm:$0xf]
      %v1099 = vld [vmem:[%s8 + $0x1c] sm:$0xf]
      %v1100 = vld [vmem:[%s8 + $0x20] sm:$0xf]
      %v1101 = vld [vmem:[%s8 + $0x24] sm:$0xf]
      %v1102 = vld [vmem:[%s8 + $0x28] sm:$0xf]
      %v1103 = vld [vmem:[%s8 + $0x2c] sm:$0xf]
      %v1104 = vld [vmem:[%s8 + $0x30] sm:$0xf]
      %v1105 = vld [vmem:[%s8 + $0x34] sm:$0xf]
      %v1106 = vld [vmem:[%s8 + $0x38] sm:$0xf]
      %v1107 = vld [vmem:[%s8 + $0x3c] sm:$0xf]
      %v1124 = vunpack.c.l.b16 %v1092
      %v1125 = vunpack.c.l.b16 %v1093
      %v1126 = vunpack.c.l.b16 %v1094
      %v1127 = vunpack.c.l.b16 %v1095
      %v1128 = vunpack.c.l.b16 %v1096
      %v1129 = vunpack.c.l.b16 %v1097
      %v1130 = vunpack.c.l.b16 %v1098
      %v1131 = vunpack.c.l.b16 %v1099
      %v1132 = vunpack.c.l.b16 %v1100
      %v1133 = vunpack.c.l.b16 %v1101
      %v1134 = vunpack.c.l.b16 %v1102
      %v1135 = vunpack.c.l.b16 %v1103
      %v1136 = vunpack.c.l.b16 %v1104
      %v1137 = vunpack.c.l.b16 %v1105
      %v1138 = vunpack.c.l.b16 %v1106
      %v1139 = vunpack.c.l.b16 %v1107
      %v1140 = vpack.c.b16 %v1125, %v1124
      %v1141 = vpack.c.b16 %v1127, %v1126
      %v1142 = vpack.c.b16 %v1129, %v1128
      %v1143 = vpack.c.b16 %v1131, %v1130
      %v1144 = vpack.c.b16 %v1133, %v1132
      %v1145 = vpack.c.b16 %v1135, %v1134
      %v1146 = vpack.c.b16 %v1137, %v1136
      %v1147 = vpack.c.b16 %v1139, %v1138
      %1156 = vmatprep.subr.bf16.mxu0 0
      %1157 = vmatpush1.bf16.msra.mxu0 %v1147
      %1158 = vmatprep.subr.bf16.mxu0 0
      %1159 = vmatpush1.bf16.msra.mxu0 %v1146
      %1160 = vmatprep.subr.bf16.mxu0 0
      %1161 = vmatpush1.bf16.msra.mxu0 %v1145
      %1162 = vmatprep.subr.bf16.mxu0 0
      %1163 = vmatpush1.bf16.msra.mxu0 %v1144
      %1164 = vmatprep.subr.bf16.mxu0 0
      %1165 = vmatpush1.bf16.msra.mxu0 %v1143
      %1166 = vmatprep.subr.bf16.mxu0 0
      %1167 = vmatpush1.bf16.msra.mxu0 %v1142
      %1168 = vmatprep.subr.bf16.mxu0 0
      %1169 = vmatpush1.bf16.msra.mxu0 %v1141
      %1170 = vmatprep.subr.bf16.mxu0 0
      %1171 = vmatpush1.bf16.msra.mxu0 %v1140
      %1172 = vmatprep.subr.bf16.mxu0 0
      %1173 = vmatpush2.bf16.msra.mxu0 0
      %1174 = vmatprep.subr.bf16.mxu0 0
      %1175 = vmatpush2.bf16.msra.mxu0 0
      %1176 = vmatprep.subr.bf16.mxu0 0
      %1177 = vmatpush2.bf16.msra.mxu0 0
      %1178 = vmatprep.subr.bf16.mxu0 0
      %1179 = vmatpush2.bf16.msra.mxu0 0
      %1180 = vmatprep.subr.bf16.mxu0 0
      %1181 = vmatpush2.bf16.msra.mxu0 0
      %1182 = vmatprep.subr.bf16.mxu0 0
      %1183 = vmatpush2.bf16.msra.mxu0 0
      %1184 = vmatprep.subr.bf16.mxu0 0
      %1185 = vmatpush2.bf16.msra.mxu0 0
      %1186 = vmatprep.subr.bf16.mxu0 0
      %1187 = vmatpush2.bf16.msra.mxu0 0
      %1188 = vmatprep.mubr.bf16.mxu0 0
      %1189 = vmatmul.mubr.bf16.gmra.mxu0 %v1091
      %v1190 = vpop.f32.mrf.mxu0
      %v1191 = vadd.f32 0.0, %v1190
      %v1192 = vpop.f32.mrf.mxu0
      %v1193 = vpop.f32.mrf.mxu0
      %v1194 = vpop.f32.mrf.mxu0
      %1195 = vdwg.mxu0
      %v1196 = vadd.f32 %v970, %v1191
      %1197 = vadd.xlane.f32.xlu0 %v1196
      %v1198 = vpop.xlane.xlu0 %1197
      %v1199 = vmul.f32 %v1198, 0.03125
      %v1200 = vmul.f32 %v1196, %v1196
      %1201 = vadd.xlane.f32.xlu0 %v1200
      %v1202 = vpop.xlane.xlu0 %1201
      %v1203 = vmul.f32 %v1202, 0.03125
      %v1204 = vmul.f32 %v1199, %v1199
      %v1205 = vsub.f32 %v1203, %v1204
      %v1206 = vmax.f32 %v1205, 0.0
      %v1207 = vsub.f32 %v1196, %v1199
      %v1208 = vadd.f32 %v1206, 1e-05
      %v1209 = vrsqrt.pop %v1208
      %v1210 = vmul.f32 %v1207, %v1209
      %v1211 = vpack.c.bf16 %v1210, %v1210
      %v1212 = vld [vmem:[%s9] sm:$0xf]
      %v1213 = vld [vmem:[%s9 + $0x4] sm:$0xf]
      %v1214 = vld [vmem:[%s9 + $0x8] sm:$0xf]
      %v1215 = vld [vmem:[%s9 + $0xc] sm:$0xf]
      %v1216 = vld [vmem:[%s9 + $0x10] sm:$0xf]
      %v1217 = vld [vmem:[%s9 + $0x14] sm:$0xf]
      %v1218 = vld [vmem:[%s9 + $0x18] sm:$0xf]
      %v1219 = vld [vmem:[%s9 + $0x1c] sm:$0xf]
      %v1220 = vld [vmem:[%s9 + $0x20] sm:$0xf]
      %v1221 = vld [vmem:[%s9 + $0x24] sm:$0xf]
      %v1222 = vld [vmem:[%s9 + $0x28] sm:$0xf]
      %v1223 = vld [vmem:[%s9 + $0x2c] sm:$0xf]
      %v1224 = vld [vmem:[%s9 + $0x30] sm:$0xf]
      %v1225 = vld [vmem:[%s9 + $0x34] sm:$0xf]
      %v1226 = vld [vmem:[%s9 + $0x38] sm:$0xf]
      %v1227 = vld [vmem:[%s9 + $0x3c] sm:$0xf]
      %v1244 = vunpack.c.l.b16 %v1212
      %v1245 = vunpack.c.l.b16 %v1213
      %v1246 = vunpack.c.l.b16 %v1214
      %v1247 = vunpack.c.l.b16 %v1215
      %v1248 = vunpack.c.l.b16 %v1216
      %v1249 = vunpack.c.l.b16 %v1217
      %v1250 = vunpack.c.l.b16 %v1218
      %v1251 = vunpack.c.l.b16 %v1219
      %v1252 = vunpack.c.l.b16 %v1220
      %v1253 = vunpack.c.l.b16 %v1221
      %v1254 = vunpack.c.l.b16 %v1222
      %v1255 = vunpack.c.l.b16 %v1223
      %v1256 = vunpack.c.l.b16 %v1224
      %v1257 = vunpack.c.l.b16 %v1225
      %v1258 = vunpack.c.l.b16 %v1226
      %v1259 = vunpack.c.l.b16 %v1227
      %v1260 = vpack.c.b16 %v1245, %v1244
      %v1261 = vpack.c.b16 %v1247, %v1246
      %v1262 = vpack.c.b16 %v1249, %v1248
      %v1263 = vpack.c.b16 %v1251, %v1250
      %v1264 = vpack.c.b16 %v1253, %v1252
      %v1265 = vpack.c.b16 %v1255, %v1254
      %v1266 = vpack.c.b16 %v1257, %v1256
      %v1267 = vpack.c.b16 %v1259, %v1258
      %1276 = vmatprep.subr.bf16.mxu0 0
      %1277 = vmatpush1.bf16.msra.mxu0 %v1267
      %1278 = vmatprep.subr.bf16.mxu0 0
      %1279 = vmatpush1.bf16.msra.mxu0 %v1266
      %1280 = vmatprep.subr.bf16.mxu0 0
      %1281 = vmatpush1.bf16.msra.mxu0 %v1265
      %1282 = vmatprep.subr.bf16.mxu0 0
      %1283 = vmatpush1.bf16.msra.mxu0 %v1264
      %1284 = vmatprep.subr.bf16.mxu0 0
      %1285 = vmatpush1.bf16.msra.mxu0 %v1263
      %1286 = vmatprep.subr.bf16.mxu0 0
      %1287 = vmatpush1.bf16.msra.mxu0 %v1262
      %1288 = vmatprep.subr.bf16.mxu0 0
      %1289 = vmatpush1.bf16.msra.mxu0 %v1261
      %1290 = vmatprep.subr.bf16.mxu0 0
      %1291 = vmatpush1.bf16.msra.mxu0 %v1260
      %1292 = vmatprep.subr.bf16.mxu0 0
      %1293 = vmatpush2.bf16.msra.mxu0 0
      %1294 = vmatprep.subr.bf16.mxu0 0
      %1295 = vmatpush2.bf16.msra.mxu0 0
      %1296 = vmatprep.subr.bf16.mxu0 0
      %1297 = vmatpush2.bf16.msra.mxu0 0
      %1298 = vmatprep.subr.bf16.mxu0 0
      %1299 = vmatpush2.bf16.msra.mxu0 0
      %1300 = vmatprep.subr.bf16.mxu0 0
      %1301 = vmatpush2.bf16.msra.mxu0 0
      %1302 = vmatprep.subr.bf16.mxu0 0
      %1303 = vmatpush2.bf16.msra.mxu0 0
      %1304 = vmatprep.subr.bf16.mxu0 0
      %1305 = vmatpush2.bf16.msra.mxu0 0
      %1306 = vmatprep.subr.bf16.mxu0 0
      %1307 = vmatpush2.bf16.msra.mxu0 0
      %1308 = vmatprep.mubr.bf16.mxu0 0
      %1309 = vmatmul.mubr.bf16.gmra.mxu0 %v1211
      %v1310 = vpop.f32.mrf.mxu0
      %v1311 = vadd.f32 0.0, %v1310
      %v1312 = vpop.f32.mrf.mxu0
      %v1313 = vpop.f32.mrf.mxu0
      %v1314 = vpop.f32.mrf.mxu0
      %1315 = vdwg.mxu0
      %vm1316 = vcmp.lt.s32.totalorder %v392, 32
      %v1317 = vsel %vm1316, %v1311, -1e+30
      %1318 = vmax.xlane.f32.xlu0 %v1317
      %v1319 = vpop.xlane.xlu0 %1318
      %v1320 = vsub.f32 %v1317, %v1319
      %v1321 = vmul.f32 %v1320, 1.442695
      %v1322 = vpow.pop %v1321
      %1323 = vadd.xlane.f32.xlu0 %v1322
      %v1324 = vpop.xlane.xlu0 %1323
      %v1325 = vlog2.pop %v1324
      %v1326 = vmul.f32 %v1325, 0.6931472
      %v1327 = vadd.f32 %v1326, %v1319
      %v1328 = vld [vmem:[%s380] sm:$0xff]
      %1329 = vset.pattern.permute.xlu0 0
      %1330 = vperm.xlu0 %1329, %v1328
      %v1331 = vpop.permute.xlu0 %1330
      %vm1332 = vcmp.eq.s32.totalorder %v392, %v1331
      %v1333 = vsel %vm1332, %v1317, 0.0
      %1334 = vadd.xlane.f32.xlu0 %v1333
      %v1335 = vpop.xlane.xlu0 %1334
      %v1336 = vsub.f32 %v1335, %v1327
      %v1337 = vld [vmem:[%s384] sm:$0xff]
      %v1338 = vsub.f32 0.0, %v1336
      %v1339 = vmul.f32 %v1338, %v1337
      %vm1340 = vcmask 7168
      %v1341 = vsel %vm1340, %v1339, 0.0
      %1342 = vadd.xlane.f32.xlu0 %v1341
      %v1343 = vpop.xlane.xlu0 %1342
      %v1344 = vrot.slane %v1343, 4
      %v1345 = vadd.f32 %v1343, %v1344
      %v1346 = vrot.slane %v1345, 2
      %v1347 = vadd.f32 %v1345, %v1346
      %v1348 = vrot.slane %v1347, 1
      %v1349 = vadd.f32 %v1347, %v1348
      %s1350 = vtos %v1349
      %v1351 = vsel %vm1340, %v1337, 0.0
      %1352 = vadd.xlane.f32.xlu0 %v1351
      %v1353 = vpop.xlane.xlu0 %1352
      %v1354 = vrot.slane %v1353, 4
      %v1355 = vadd.f32 %v1353, %v1354
      %v1356 = vrot.slane %v1355, 2
      %v1357 = vadd.f32 %v1355, %v1356
      %v1358 = vrot.slane %v1357, 1
      %v1359 = vadd.f32 %v1357, %v1358
      %s1360 = vtos %v1359
      %v1361 = vlaneseq
      %v1362 = vshrl.u32 %v1361, 7
      %vm1363 = vcmp.eq.s32.totalorder %v1362, 0
      %vm1364 = vcmp.eq.s32.totalorder %v392, 0
      %vm1365 = vmand %vm1363, %vm1364
      %v1366 = vstv %s1350
      %v1367 = vsel %vm1365, %v1366, 0.0
      %vm1368 = vcmp.eq.s32.totalorder %v392, 1
      %vm1369 = vmand %vm1363, %vm1368
      %v1370 = vstv %s1360
      %v1371 = vsel %vm1369, %v1370, 0.0
      %v1372 = vadd.f32 %v1367, %v1371
      %1373 = vst [vmem:[%s388] sm:$0xff] %v1372
      %p1374 = scmp.lt.s32.totalorder %s21, 1
      %s1375 = scalar_select %p1374, %s21, 1
      %s1376 = smul.addr %s1375, 8
      %s1377 = scalar_lea.vmem %s10, %s1376
      // Predicated region
      $region61: #{maskgit_train_wrapper_forward.1} parent=59 // pred_check
        %p1378 = pneg %p264
      $region62: #{maskgit_train_wrapper_forward.1} parent=59 // pred_check_branch
        %1380 = sbr.rel (%p1378) target = $region64
      $region63: #{maskgit_train_wrapper_forward.1} parent=59 // pred_region
        _
      $region64: #{maskgit_train_wrapper_forward.1} parent=59 // pred_fallthru
        _
    $region60: #{maskgit_train_wrapper_forward.1} parent=5 // pred_fallthru
      _
    %p1381 = scmp.le.s32.totalorder 2, %s16
    // Predicated region
    $region65: #{maskgit_train_wrapper_forward.1} parent=5 // pred_check
      %p1382 = pneg %p1381
    $region66: #{maskgit_train_wrapper_forward.1} parent=5 // pred_check_branch
      %1384 = sbr.rel (%p1382) target = $region68
    $region67: #{maskgit_train_wrapper_forward.1} parent=5 // pred_region
      %s1385 = ssub.s32 %s16, 2
      // Predicated region
      $region69: #{maskgit_train_wrapper_forward.1} parent=67 // pred_check
        %p1386 = pneg %p270
      $region70: #{maskgit_train_wrapper_forward.1} parent=67 // pred_check_branch
        %1388 = sbr.rel (%p1386) target = $region72
      $region71: #{maskgit_train_wrapper_forward.1} parent=67 // pred_region
        %p1389 = scmp.lt.s32.totalorder %s22, 1
        %s1390 = scalar_select %p1389, %s22, 1
        %s1391 = smul.addr %s1390, 8
        %s1392 = scalar_lea.vmem %s10, %s1391
      $region72: #{maskgit_train_wrapper_forward.1} parent=67 // pred_fallthru
        _
    $region68: #{maskgit_train_wrapper_forward.1} parent=5 // pred_fallthru
      _
  $region6: #{maskgit_train_wrapper_forward.1} parent=0 // loop_footer
    %s20 = sadd.s32 1, %s16
  $region7: #{maskgit_train_wrapper_forward.1} parent=0 // loop_footer_branch
    %15 = sbr.rel target = $region3
  $region8: #{maskgit_train_wrapper_forward.1} parent=0 // loop_exit
    _

</llo_original>
